<compile_context>
chip_gen: v6e
topology: v6e:2x2x1
jax: 0.10.0
libtpu: 0.0.40
codegen_flags: <defaults>
</compile_context>

<pallas_src>
import functools
import math

import jax
import jax.numpy as jnp
from jax.experimental import pallas as pl
from jax.experimental.pallas import tpu as pltpu


# ----------------------------------------------------------------------------
# Device-dependent tuning
# ----------------------------------------------------------------------------

def _tpu_tuning():
    kind = ""
    try:
        kind = jax.devices()[0].device_kind.lower()
    except Exception:
        pass
    if "v5 lite" in kind or "v5e" in kind or "v5litepod" in kind:
        # v5e: 128x128 MXU, 16 MiB default scoped VMEM -> 128 tiles + explicit limit.
        return 128, 128, 32 * 1024 * 1024
    if "7" in kind:
        # v7x: 64 MiB physical VMEM per TensorCore -> keep headroom.
        return 256, 256, 48 * 1024 * 1024
    return 256, 256, 64 * 1024 * 1024


_TN_MAX, _TK_MAX, _VMEM_LIMIT = _tpu_tuning()


def _cparams(dims):
    return pltpu.CompilerParams(dimension_semantics=dims,
                                vmem_limit_bytes=_VMEM_LIMIT)


def _round_up(x, m):
    return ((x + m - 1) // m) * m


def _pick_tile(dim, max_tile):
    """Largest multiple of 128 dividing `dim` (capped at max_tile), else the full dim."""
    if dim % 128 == 0:
        t = min(max_tile, dim)
        while dim % t:
            t -= 128
        return max(t, 128)
    return dim


# ----------------------------------------------------------------------------
# Tiled fused matmul:  y = act( LN?(x) @ w + b ) [+ residual]
# ----------------------------------------------------------------------------

def _mm_kernel(*refs, nk, act, has_ln, has_res, eps=1e-5):
    x_ref, w_ref, b_ref = refs[0], refs[1], refs[2]
    pos = 3
    if has_ln:
        g_ref, be_ref = refs[pos], refs[pos + 1]
        pos += 2
    if has_res:
        r_ref = refs[pos]
        pos += 1
    o_ref, acc_ref = refs[pos], refs[pos + 1]

    k = pl.program_id(2)

    @pl.when(k == 0)
    def _():
        acc_ref[...] = jnp.zeros_like(acc_ref)

    if has_ln:                         # fused pre-norm; wrapper guarantees full-K block
        x = x_ref[...].astype(jnp.float32)
        mu = jnp.mean(x, axis=-1, keepdims=True)
        var = jnp.mean((x - mu) ** 2, axis=-1, keepdims=True)
        x = (x - mu) * jax.lax.rsqrt(var + eps)
        xb = (x * g_ref[...] + be_ref[...]).astype(jnp.bfloat16)
    else:
        xb = x_ref[...].astype(jnp.bfloat16)   # single cast; no f32 round-trip
    acc_ref[...] += jnp.dot(xb, w_ref[...], preferred_element_type=jnp.float32)

    @pl.when(k == nk - 1)
    def _():
        y = acc_ref[...] + b_ref[...]
        if act == "relu":
            y = jnp.maximum(y, 0.0)
        elif act == "gelu":
            # TODO(synk): PyTorch nn.GELU default is exact erf; tanh approx used here.
            y = jax.nn.gelu(y, approximate=True)
        elif act == "softplus":
            y = jnp.maximum(y, 0.0) + jnp.log1p(jnp.exp(-jnp.abs(y)))
        if has_res:
            y = y + r_ref[...].astype(jnp.float32)
        o_ref[...] = y.astype(o_ref.dtype)


def pallas_linear(x, w, b, act="none", ln=None, residual=None,
                  out_dtype=jnp.float32, tm_max=512, tn_max=None, tk_max=None):
    """y = act(LN?(x) @ w + b) [+ residual]; x: (..., K), w: (K, N), b: (N,).

    Tiled over (M, N, K) with an f32 VMEM accumulator; bf16 feeds the MXU.
    Tile widths are device-dependent (128 on v5e, 256 otherwise); K is only
    tiled when it is a 128-multiple and LN is not fused (LN needs the full row).
    """
    K, N = w.shape
    lead = x.shape[:-1]
    x2 = x.reshape(-1, K)
    M = x2.shape[0]
    tn_max = _TN_MAX if tn_max is None else tn_max
    tk_max = _TK_MAX if tk_max is None else tk_max

    tm = min(tm_max, _round_up(M, 8))
    Mp = _round_up(M, tm)
    tn = _pick_tile(N, tn_max)
    tk = K if ln is not None else _pick_tile(K, tk_max)
    nk = K // tk
    assert K % tk == 0 and N % tn == 0

    if Mp != M:
        x2 = jnp.pad(x2, ((0, Mp - M), (0, 0)))

    in_specs = [
        pl.BlockSpec((tm, tk), lambda i, j, k: (i, k)),
        pl.BlockSpec((tk, tn), lambda i, j, k: (k, j)),
        pl.BlockSpec((1, tn), lambda i, j, k: (0, j)),
    ]
    args = [x2, w.astype(jnp.bfloat16), b.reshape(1, N).astype(jnp.float32)]
    if ln is not None:
        g, be = ln
        in_specs += [pl.BlockSpec((1, K), lambda i, j, k: (0, 0)),
                     pl.BlockSpec((1, K), lambda i, j, k: (0, 0))]
        args += [g.reshape(1, K).astype(jnp.float32),
                 be.reshape(1, K).astype(jnp.float32)]
    if residual is not None:
        r2 = residual.reshape(-1, N)          # native dtype; cast inside the kernel
        if Mp != M:
            r2 = jnp.pad(r2, ((0, Mp - M), (0, 0)))
        in_specs.append(pl.BlockSpec((tm, tn), lambda i, j, k: (i, j)))
        args.append(r2)

    out = pl.pallas_call(
        functools.partial(_mm_kernel, nk=nk, act=act,
                          has_ln=ln is not None, has_res=residual is not None),
        out_shape=jax.ShapeDtypeStruct((Mp, N), out_dtype),
        grid=(Mp // tm, N // tn, nk),
        in_specs=in_specs,
        out_specs=pl.BlockSpec((tm, tn), lambda i, j, k: (i, j)),
        scratch_shapes=[pltpu.VMEM((tm, tn), jnp.float32)],
        compiler_params=_cparams(("parallel", "parallel", "arbitrary")),
    )(*args)
    return out[:M].reshape(*lead, N)


# ----------------------------------------------------------------------------
# MotifScanner conv: ONE im2col-in-VMEM matmul + fused normalize + ReLU
# ----------------------------------------------------------------------------

def _motif_conv_kernel(x_ref, w_ref, mms_ref, o_ref, *, ksize, L):
    # Build the (L, k*Cin) im2col window in VMEM from static shifted slices,
    # then do a single MXU matmul instead of k tiny K=Cin matmuls.
    win = jnp.concatenate([x_ref[0, pl.ds(i, L), :] for i in range(ksize)],
                          axis=-1)                                    # (L, k*Cin) bf16
    acc = jnp.dot(win, w_ref[...], preferred_element_type=jnp.float32)  # (L, CM)
    mms = mms_ref[0]                                  # (2, CM): row0 mean, row1 std
    y = jnp.maximum((acc - mms[0:1, :]) / mms[1:2, :], 0.0)
    o_ref[0] = y.astype(o_ref.dtype)


def pallas_motif_conv(peak_seq, w2, motif_mean_std):
    """MotifScanner conv ('same') with strand combination folded into w2 and
    the per-batch mean/std normalization + ReLU fused into the epilogue.
    w2: (k*Cin, CM) with CM a 128-multiple (padded channels have zero weights)."""
    B, L, Cin = peak_seq.shape
    KC, CM = w2.shape
    ksize = KC // Cin
    pad_l = ksize // 2
    pad_r = ksize - 1 - pad_l
    xp = jnp.pad(peak_seq, ((0, 0), (pad_l, pad_r), (0, 0))).astype(jnp.bfloat16)
    Lp = L + ksize - 1
    # TODO(synk): whole-L blocks per batch; realistic lengths should tile L with a
    # (k-1)-row halo per block to bound VMEM (critical on v7x's 64 MiB).
    return pl.pallas_call(
        functools.partial(_motif_conv_kernel, ksize=ksize, L=L),
        out_shape=jax.ShapeDtypeStruct((B, L, CM), jnp.bfloat16),
        grid=(B,),
        in_specs=[
            pl.BlockSpec((1, Lp, Cin), lambda bi: (bi, 0, 0)),
            pl.BlockSpec((KC, CM), lambda bi: (0, 0)),
            pl.BlockSpec((1, 2, CM), lambda bi: (bi, 0, 0)),
        ],
        out_specs=pl.BlockSpec((1, L, CM), lambda bi: (bi, 0, 0)),
        compiler_params=_cparams(("parallel",)),
    )(xp, w2.astype(jnp.bfloat16), motif_mean_std.astype(jnp.float32))


# ----------------------------------------------------------------------------
# Fused ATACSplitPool: atac conv + joint conv (im2col matmul) + chunk mean pool
# ----------------------------------------------------------------------------

def _atac_split_pool_kernel(x_ref, atac_ref, valid_ref, wa_ref, ba_ref,
                            wj_ref, bj_ref, o_ref, *,
                            L, chunk, R, cm, j_ch, ka, kj):
    x = x_ref[0]                                            # (L, CM) bf16
    # --- atac conv (Cin=1): ka broadcast taps on the VPU, stays in VMEM ------
    atac = atac_ref[0].astype(jnp.float32)                  # (L+ka-1, 1)
    wa = wa_ref[...]                                        # (ka, A) f32
    af = ba_ref[...]                                        # (1, A) -> broadcasts
    for i in range(ka):
        af = af + atac[i:i + L] * wa[i:i + 1, :]            # (L, A)

    # --- joint conv ('same', zero-padded joint_in) as ONE im2col matmul ------
    pl_j = kj // 2
    pr_j = kj - 1 - pl_j
    zx = jnp.zeros((1, cm), x.dtype)
    za = jnp.zeros((1, af.shape[-1]), jnp.bfloat16)
    xp = jnp.concatenate([zx] * pl_j + [x] + [zx] * pr_j, axis=0)            # (L+kj-1, CM)
    afp = jnp.concatenate([za] * pl_j + [af.astype(jnp.bfloat16)] + [za] * pr_j,
                          axis=0)                                            # (L+kj-1, A)
    pieces = []
    for i in range(kj):                                     # tap-major, matches w reshape
        pieces.append(xp[i:i + L])
        pieces.append(afp[i:i + L])
    win = jnp.concatenate(pieces, axis=-1)                  # (L, kj*(CM+A)) bf16
    jf = jnp.dot(win, wj_ref[...], preferred_element_type=jnp.float32) + bj_ref[...]

    # --- chunk mean pool: reshape + sublane reduce (no dense (R,L) seg matrix)
    # TODO(synk): reference ATACSplitPool uses ragged per-peak chunk sizes
    # (torch.split); uniform chunks assumed here.
    inv = 1.0 / chunk
    px = jnp.sum(x.astype(jnp.float32).reshape(R, chunk, cm), axis=1) * inv   # (R, CM)
    pj = jnp.sum(jf.reshape(R, chunk, j_ch), axis=1) * inv                    # (R, J)
    pooled = jnp.concatenate([px, pj], axis=-1) * valid_ref[0]                # (R, CM+J)
    o_ref[0] = pooled.astype(o_ref.dtype)


def pallas_atac_split_pool(x, atac, valid, wa, ba, wj2, bj, R, chunk):
    """x: (B,L,CM) bf16 motif features, atac: (B,L) raw signal,
    valid: (B,R,1) region mask, wa: (ka,A), wj2: (kj*(CM+A), J).
    Returns (B, R, CM + J) region features (x-pool channels first)."""
    B, L, CM = x.shape
    ka, A = wa.shape
    J = wj2.shape[1]
    kj = wj2.shape[0] // (CM + A)
    pad_la = ka // 2
    pad_ra = ka - 1 - pad_la
    atac_p = jnp.pad(atac, ((0, 0), (pad_la, pad_ra)))[..., None]   # (B, L+ka-1, 1)
    return pl.pallas_call(
        functools.partial(_atac_split_pool_kernel, L=L, chunk=chunk, R=R,
                          cm=CM, j_ch=J, ka=ka, kj=kj),
        out_shape=jax.ShapeDtypeStruct((B, R, CM + J), jnp.float32),
        grid=(B,),
        in_specs=[
            pl.BlockSpec((1, L, CM), lambda bi: (bi, 0, 0)),
            pl.BlockSpec((1, L + ka - 1, 1), lambda bi: (bi, 0, 0)),
            pl.BlockSpec((1, R, 1), lambda bi: (bi, 0, 0)),
            pl.BlockSpec((ka, A), lambda bi: (0, 0)),
            pl.BlockSpec((1, A), lambda bi: (0, 0)),
            pl.BlockSpec((kj * (CM + A), J), lambda bi: (0, 0)),
            pl.BlockSpec((1, J), lambda bi: (0, 0)),
        ],
        out_specs=pl.BlockSpec((1, R, CM + J), lambda bi: (bi, 0, 0)),
        compiler_params=_cparams(("parallel",)),
    )(x, atac_p, valid,
      wa.astype(jnp.float32), ba.reshape(1, A).astype(jnp.float32),
      wj2.astype(jnp.bfloat16), bj.reshape(1, J).astype(jnp.float32))


# ----------------------------------------------------------------------------
# Fused ATAC head: softplus(relu(x @ w1 + b1) @ w2 + b2), h stays in VMEM
# ----------------------------------------------------------------------------

def _mlp_head_kernel(x_ref, w1_ref, b1_ref, w2_ref, b2_ref, o_ref):
    x = x_ref[...].astype(jnp.bfloat16)
    h = jnp.dot(x, w1_ref[...], preferred_element_type=jnp.float32) + b1_ref[...]
    h = jnp.maximum(h, 0.0)
    y = jnp.dot(h.astype(jnp.bfloat16), w2_ref[...],
                preferred_element_type=jnp.float32) + b2_ref[...]
    o_ref[...] = jnp.maximum(y, 0.0) + jnp.log1p(jnp.exp(-jnp.abs(y)))


def pallas_atac_head(x, w1, b1, w2, b2):
    lead = x.shape[:-1]
    K = x.shape[-1]
    D = w1.shape[1]
    x2 = x.reshape(-1, K)
    M = x2.shape[0]
    tm = min(256, _round_up(M, 8))
    Mp = _round_up(M, tm)
    if Mp != M:
        x2 = jnp.pad(x2, ((0, Mp - M), (0, 0)))
    out = pl.pallas_call(
        _mlp_head_kernel,
        out_shape=jax.ShapeDtypeStruct((Mp, 1), jnp.float32),
        grid=(Mp // tm,),
        in_specs=[pl.BlockSpec((tm, K), lambda i: (i, 0)),
                  pl.BlockSpec((K, D), lambda i: (0, 0)),
                  pl.BlockSpec((1, D), lambda i: (0, 0)),
                  pl.BlockSpec((D, 1), lambda i: (0, 0)),
                  pl.BlockSpec((1, 1), lambda i: (0, 0))],
        out_specs=pl.BlockSpec((tm, 1), lambda i: (i, 0)),
        compiler_params=_cparams(("parallel",)),
    )(x2, w1.astype(jnp.bfloat16), b1.reshape(1, D).astype(jnp.float32),
      w2.astype(jnp.bfloat16), b2.reshape(1, 1).astype(jnp.float32))
    return out[:M].reshape(*lead, 1)


# ----------------------------------------------------------------------------
# Multi-head attention: per-head slicing of packed qkv inside the kernel
# (no host-side reshape/transpose), key-padding bias, f32 softmax.
# ----------------------------------------------------------------------------

def _attn_kernel(qkv_ref, bias_ref, o_ref, *, nheads, dh, scale):
    D = nheads * dh
    bias = bias_ref[...]                                    # (1, S) f32
    outs = []
    for h in range(nheads):
        q = qkv_ref[0, :, pl.ds(h * dh, dh)].astype(jnp.bfloat16)          # (S, Dh)
        k = qkv_ref[0, :, pl.ds(D + h * dh, dh)].astype(jnp.bfloat16)
        v = qkv_ref[0, :, pl.ds(2 * D + h * dh, dh)].astype(jnp.bfloat16)
        s = jax.lax.dot_general(q, k, (((1,), (1,)), ((), ())),
                                preferred_element_type=jnp.float32)         # (S, S)
        s = s * scale + bias
        s = s - jnp.max(s, axis=-1, keepdims=True)
        p = jnp.exp(s)
        l = jnp.sum(p, axis=-1, keepdims=True)
        o = jnp.dot(p.astype(jnp.bfloat16), v, preferred_element_type=jnp.float32)
        outs.append((o * pl.reciprocal(l, approx=True)).astype(o_ref.dtype))
    o_ref[0] = jnp.concatenate(outs, axis=-1)               # lane-dense (S, D) store


def pallas_attention(qkv, key_bias, nheads, dh, scale):
    """qkv: (B, S, 3*D) packed; key_bias: (B, S) additive key-padding bias."""
    B, S, threeD = qkv.shape
    D = nheads * dh
    # TODO(synk): realistic S on v7x should tile heads/keys with an online-softmax
    # accumulator instead of holding full (S,S) scores per head.
    return pl.pallas_call(
        functools.partial(_attn_kernel, nheads=nheads, dh=dh, scale=scale),
        out_shape=jax.ShapeDtypeStruct((B, S, D), jnp.bfloat16),
        grid=(B,),
        in_specs=[pl.BlockSpec((1, S, threeD), lambda bi: (bi, 0, 0)),
                  pl.BlockSpec((1, S), lambda bi: (bi, 0))],
        out_specs=pl.BlockSpec((1, S, D), lambda bi: (bi, 0, 0)),
        compiler_params=_cparams(("parallel",)),
    )(qkv, key_bias.astype(jnp.float32))


# ----------------------------------------------------------------------------
# Parameter setup / small JAX glue
# ----------------------------------------------------------------------------

def sinusoidal_pe(length, dim):
    pos = jnp.arange(length)[:, None].astype(jnp.float32)
    div = jnp.exp(jnp.arange(0, dim, 2).astype(jnp.float32) * (-math.log(10000.0) / dim))
    pe = jnp.zeros((length, dim), jnp.float32)
    pe = pe.at[:, 0::2].set(jnp.sin(pos * div))
    pe = pe.at[:, 1::2].set(jnp.cos(pos * div))
    return pe


def xavier(key, fan_in, fan_out):
    limit = math.sqrt(6.0 / (fan_in + fan_out))
    return jax.random.uniform(key, (fan_in, fan_out), jnp.float32, -limit, limit)


def strand_combination_matrix(num_motif):
    """bidirectional_except_ctcf as a linear map (2*nm -> nm+2), folded into conv weights."""
    # TODO(synk): exact CTCF motif index & PWM priors unavailable; index 0 + synthetic weights used.
    nm = num_motif
    S = jnp.zeros((2 * nm, nm + 2), jnp.float32)
    idx = jnp.arange(nm)
    S = S.at[idx, idx].set(1.0)           # forward strand -> summed channel
    S = S.at[nm + idx, idx].set(1.0)      # reverse strand -> summed channel
    S = S.at[0, nm].set(1.0)              # CTCF forward kept strand-specific
    S = S.at[nm, nm + 1].set(1.0)         # CTCF reverse kept strand-specific
    return S


def _pad_k_rows(w, motif_dim, CM):
    """Insert zero rows for the padded motif channels of the pooled features."""
    return jnp.concatenate([w[:motif_dim],
                            jnp.zeros((CM - motif_dim, w.shape[1]), w.dtype),
                            w[motif_dim:]], axis=0)


def init_params(key, cfg):
    nm = cfg["num_motif"]
    motif_dim = nm + 2
    region_dim = motif_dim + cfg["joint_kernel_num"]
    D = cfg["d_model"]
    ks = jax.random.split(key, 64)
    ki = iter(ks)
    p = {}
    p["motif_w"] = xavier(next(ki), cfg["motif_kernel"] * 4, 2 * nm)
    p["atac_conv_w"] = xavier(next(ki), cfg["atac_kernel_size"] * 1,
                              cfg["atac_kernel_num"]).reshape(
        cfg["atac_kernel_size"], 1, cfg["atac_kernel_num"])
    p["atac_conv_b"] = jnp.zeros((cfg["atac_kernel_num"],), jnp.float32)
    jc_cin = motif_dim + cfg["atac_kernel_num"]
    p["joint_conv_w"] = xavier(next(ki), cfg["joint_kernel_size"] * jc_cin,
                               cfg["joint_kernel_num"]).reshape(
        cfg["joint_kernel_size"], jc_cin, cfg["joint_kernel_num"])
    p["joint_conv_b"] = jnp.zeros((cfg["joint_kernel_num"],), jnp.float32)
    p["embed_w"] = xavier(next(ki), region_dim, D)
    p["embed_b"] = jnp.zeros((D,), jnp.float32)
    p["atac_head_w1"] = xavier(next(ki), region_dim, D)
    p["atac_head_b1"] = jnp.zeros((D,), jnp.float32)
    p["atac_head_w2"] = xavier(next(ki), D, 1)
    p["atac_head_b2"] = jnp.zeros((1,), jnp.float32)
    p["abs_pos"] = sinusoidal_pe(cfg["max_n_peaks"], D)
    layers = []
    for _ in range(cfg["num_layers"]):
        layers.append({
            "ln1_g": jnp.ones((D,), jnp.float32), "ln1_b": jnp.zeros((D,), jnp.float32),
            "qkv_w": xavier(next(ki), D, 3 * D), "qkv_b": jnp.zeros((3 * D,), jnp.float32),
            "proj_w": xavier(next(ki), D, D), "proj_b": jnp.zeros((D,), jnp.float32),
            "ln2_g": jnp.ones((D,), jnp.float32), "ln2_b": jnp.zeros((D,), jnp.float32),
            "fc1_w": xavier(next(ki), D, 4 * D), "fc1_b": jnp.zeros((4 * D,), jnp.float32),
            "fc2_w": xavier(next(ki), 4 * D, D), "fc2_b": jnp.zeros((D,), jnp.float32),
        })
    p["layers"] = layers
    p["norm_g"] = jnp.ones((D,), jnp.float32)
    p["norm_b"] = jnp.zeros((D,), jnp.float32)
    p["exp_w"] = xavier(next(ki), D, cfg["output_dim"])
    p["exp_b"] = jnp.zeros((cfg["output_dim"],), jnp.float32)
    p["conf_w"] = xavier(next(ki), D, 50)
    p["conf_b"] = jnp.zeros((50,), jnp.float32)
    return p


# ----------------------------------------------------------------------------
# Forward pass (mirrors GETFinetuneExpATAC.forward)
# ----------------------------------------------------------------------------

def get_finetune_exp_atac_forward(params, peak_seq, atac, mask, padding_mask,
                                  chunk_size, n_peaks, max_n_peaks,
                                  motif_mean_std, other_labels, cfg):
    del mask  # unused in the reference forward
    B, L, _ = peak_seq.shape
    nm = cfg["num_motif"]
    motif_dim = nm + 2
    CM = _round_up(motif_dim, 128)              # lane-dense motif channels
    A = cfg["atac_kernel_num"]
    J = cfg["joint_kernel_num"]
    R = max_n_peaks
    D = cfg["d_model"]
    H = cfg["nhead"]
    Dh = D // H

    # --- MotifScanner: strand combine folded into weights, channels padded to CM,
    #     single im2col matmul + normalize + ReLU in one kernel.
    S = strand_combination_matrix(nm)
    wm = jnp.einsum("kco,om->kcm",
                    params["motif_w"].reshape(cfg["motif_kernel"], 4, 2 * nm), S)
    wm = jnp.pad(wm, ((0, 0), (0, 0), (0, CM - motif_dim)))
    wm2 = wm.reshape(cfg["motif_kernel"] * 4, CM)
    mean_p = jnp.pad(motif_mean_std[:, 0, :], ((0, 0), (0, CM - motif_dim)))
    std_p = jnp.pad(motif_mean_std[:, 1, :], ((0, 0), (0, CM - motif_dim)),
                    constant_values=1.0)
    mms_p = jnp.stack([mean_p, std_p], axis=1)                      # (B, 2, CM)
    x = pallas_motif_conv(peak_seq, wm2, mms_p)                     # (B, L, CM) bf16

    # --- ATACSplitPool: fused atac conv + joint conv + chunk mean pool --------
    wj = params["joint_conv_w"]                                     # (kj, motif_dim+A, J)
    kj = wj.shape[0]
    wj_pad = jnp.concatenate(
        [wj[:, :motif_dim, :],
         jnp.zeros((kj, CM - motif_dim, J), wj.dtype),
         wj[:, motif_dim:, :]], axis=1)                             # (kj, CM+A, J)
    wj2 = wj_pad.reshape(kj * (CM + A), J)
    wa = params["atac_conv_w"][:, 0, :]                             # (ka, A)
    valid = (jnp.arange(R)[None, :] < n_peaks[:, None]).astype(jnp.float32)[..., None]
    x_original = pallas_atac_split_pool(x, atac, valid, wa, params["atac_conv_b"],
                                        wj2, params["joint_conv_b"], R, chunk_size)
    # (B, R, CM + J); padded motif channels are exactly zero.

    tss_mask = other_labels[:, :, 1]  # computed but unused downstream (mirrors reference)
    del tss_mask

    # --- ATAC head + softplus (one fused kernel, h stays in VMEM) ------------
    w1p = _pad_k_rows(params["atac_head_w1"], motif_dim, CM)
    atpm = pallas_atac_head(x_original, w1p, params["atac_head_b1"],
                            params["atac_head_w2"], params["atac_head_b2"])

    # --- RegionEmbed with the Absolute positional encoding fused as a residual
    # TODO(synk): CTCFPositionalEncoding skipped — reference forward references
    # an undefined `ctcf_pos`; only the Absolute component is applied.
    embed_wp = _pad_k_rows(params["embed_w"], motif_dim, CM)
    pos = jnp.broadcast_to(params["abs_pos"][None, :R, :], (B, R, D))
    xf = pallas_linear(x_original, embed_wp, params["embed_b"],
                       residual=pos, out_dtype=jnp.bfloat16)

    # --- GETTransformer encoder (pre-norm; LN fused into QKV/FC1, residual into
    #     proj/FC2; bf16 activations between kernels, f32 accumulate)
    scale = Dh ** -0.5
    key_bias = jnp.where(padding_mask, -1e9, 0.0).astype(jnp.float32)   # (B, R)
    for lyr in params["layers"]:
        qkv = pallas_linear(xf, lyr["qkv_w"], lyr["qkv_b"],
                            ln=(lyr["ln1_g"], lyr["ln1_b"]),
                            out_dtype=jnp.bfloat16)                     # (B, R, 3D)
        attn = pallas_attention(qkv, key_bias, H, Dh, scale)            # (B, R, D)
        xf = pallas_linear(attn, lyr["proj_w"], lyr["proj_b"],
                           residual=xf, out_dtype=jnp.bfloat16)
        hmlp = pallas_linear(xf, lyr["fc1_w"], lyr["fc1_b"], act="gelu",
                             ln=(lyr["ln2_g"], lyr["ln2_b"]),
                             out_dtype=jnp.bfloat16)
        xf = pallas_linear(hmlp, lyr["fc2_w"], lyr["fc2_b"],
                           residual=xf, out_dtype=jnp.bfloat16)
        # TODO(synk): dropout / drop-path omitted (inference-mode identity).

    # --- final LayerNorm fused into one combined expression+confidence head ---
    head_w = jnp.concatenate([params["exp_w"], params["conf_w"]], axis=1)    # (D, 1+50)
    head_b = jnp.concatenate([params["exp_b"], params["conf_b"]], axis=0)
    out = pallas_linear(xf, head_w, head_b, act="softplus",
                        ln=(params["norm_g"], params["norm_b"]))
    exp = out[..., :cfg["output_dim"]]
    confidence = out[..., cfg["output_dim"]:]
    # NOTE: padded regions (padding_mask True) carry unmasked values, as in the
    # reference; callers slice by n_peaks.
    return atpm, exp, confidence


# ----------------------------------------------------------------------------
# Driver
# ----------------------------------------------------------------------------

if __name__ == "__main__":
    cfg = dict(
        num_motif=16,          # -> motif_dim = 18
        motif_kernel=29,
        atac_kernel_num=8,
        atac_kernel_size=3,
        joint_kernel_num=8,
        joint_kernel_size=3,
        d_model=128,
        nhead=4,
        num_layers=2,
        output_dim=1,
        max_n_peaks=8,
    )
    B = 2
    R = cfg["max_n_peaks"]
    chunk_size = 32
    L = R * chunk_size
    motif_dim = cfg["num_motif"] + 2

    key = jax.random.PRNGKey(0)
    k_param, k_seq, k_atac, k_mms, k_ol = jax.random.split(key, 5)
    params = init_params(k_param, cfg)

    # Inputs
    base_idx = jax.random.randint(k_seq, (B, L), 0, 4)
    peak_seq = jax.nn.one_hot(base_idx, 4, dtype=jnp.bfloat16)          # (B, L, 4) bf16
    atac = jax.random.uniform(k_atac, (B, L), jnp.float32, 0.0, 2.0)    # (B, L)
    n_peaks = jnp.array([R, R - 2], dtype=jnp.int32)
    padding_mask = jnp.arange(R)[None, :] >= n_peaks[:, None]           # True = padded
    mask = jnp.zeros((B, R), jnp.bool_)                                 # unused
    mms_mean = 0.1 * jax.random.normal(k_mms, (B, motif_dim), jnp.float32)
    mms_std = jax.random.uniform(jax.random.fold_in(k_mms, 1),
                                 (B, motif_dim), jnp.float32, 0.5, 1.5)
    motif_mean_std = jnp.stack([mms_mean, mms_std], axis=1)             # (B, 2, motif_dim)
    other_labels = jax.random.uniform(k_ol, (B, R, 3), jnp.float32)

    atpm, exp, confidence = get_finetune_exp_atac_forward(
        params, peak_seq, atac, mask, padding_mask,
        chunk_size, n_peaks, R, motif_mean_std, other_labels, cfg)

    jax.block_until_ready((atpm, exp, confidence))
    assert atpm.shape == (B, R, 1)
    assert exp.shape == (B, R, cfg["output_dim"])
    assert confidence.shape == (B, R, 50)
    assert bool(jnp.all(jnp.isfinite(atpm))) and bool(jnp.all(jnp.isfinite(exp))) \
        and bool(jnp.all(jnp.isfinite(confidence)))
    print("KERNEL_OK")
</pallas_src>

<mosaic_0001>
module attributes {stable_mosaic.version = 11 : i64} {
  func.func @_motif_conv_kernel(%arg0: i32, %arg1: memref<1x284x4xbf16, #tpu.memory_space<vmem>>, %arg2: memref<116x128xbf16, #tpu.memory_space<vmem>>, %arg3: memref<1x2x128xf32, #tpu.memory_space<vmem>>, %arg4: memref<1x256x128xbf16, #tpu.memory_space<vmem>>) attributes {dimension_semantics = [#tpu.dimension_semantics<parallel>], iteration_bounds = array<i64: 2>, scalar_prefetch = 0 : i64, scratch_operands = 0 : i64, tpu.core_type = #tpu.core_type<tc>, window_params = [{transform_indices = @transform_0, window_bounds = array<i64: 1, 284, 4>}, {pipeline_mode = #tpu.pipeline_mode<synchronous>, transform_indices = @transform_1, window_bounds = array<i64: 116, 128>}, {transform_indices = @transform_2, window_bounds = array<i64: 1, 2, 128>}, {transform_indices = @transform_3, window_bounds = array<i64: 1, 256, 128>}]} {
    %c0 = arith.constant 0 : index
    %c0_0 = arith.constant 0 : index
    %c0_1 = arith.constant 0 : index
    %0 = vector.load %arg1[%c0, %c0_0, %c0_1] : memref<1x284x4xbf16, #tpu.memory_space<vmem>>, vector<1x256x4xbf16>
    %1 = vector.shape_cast %0 : vector<1x256x4xbf16> to vector<256x4xbf16>
    %c0_2 = arith.constant 0 : index
    %c1 = arith.constant 1 : index
    %c0_3 = arith.constant 0 : index
    %2 = vector.load %arg1[%c0_2, %c1, %c0_3] : memref<1x284x4xbf16, #tpu.memory_space<vmem>>, vector<1x256x4xbf16>
    %3 = vector.shape_cast %2 : vector<1x256x4xbf16> to vector<256x4xbf16>
    %c0_4 = arith.constant 0 : index
    %c2 = arith.constant 2 : index
    %c0_5 = arith.constant 0 : index
    %4 = vector.load %arg1[%c0_4, %c2, %c0_5] : memref<1x284x4xbf16, #tpu.memory_space<vmem>>, vector<1x256x4xbf16>
    %5 = vector.shape_cast %4 : vector<1x256x4xbf16> to vector<256x4xbf16>
    %c0_6 = arith.constant 0 : index
    %c3 = arith.constant 3 : index
    %c0_7 = arith.constant 0 : index
    %6 = vector.load %arg1[%c0_6, %c3, %c0_7] : memref<1x284x4xbf16, #tpu.memory_space<vmem>>, vector<1x256x4xbf16>
    %7 = vector.shape_cast %6 : vector<1x256x4xbf16> to vector<256x4xbf16>
    %c0_8 = arith.constant 0 : index
    %c4 = arith.constant 4 : index
    %c0_9 = arith.constant 0 : index
    %8 = vector.load %arg1[%c0_8, %c4, %c0_9] : memref<1x284x4xbf16, #tpu.memory_space<vmem>>, vector<1x256x4xbf16>
    %9 = vector.shape_cast %8 : vector<1x256x4xbf16> to vector<256x4xbf16>
    %c0_10 = arith.constant 0 : index
    %c5 = arith.constant 5 : index
    %c0_11 = arith.constant 0 : index
    %10 = vector.load %arg1[%c0_10, %c5, %c0_11] : memref<1x284x4xbf16, #tpu.memory_space<vmem>>, vector<1x256x4xbf16>
    %11 = vector.shape_cast %10 : vector<1x256x4xbf16> to vector<256x4xbf16>
    %c0_12 = arith.constant 0 : index
    %c6 = arith.constant 6 : index
    %c0_13 = arith.constant 0 : index
    %12 = vector.load %arg1[%c0_12, %c6, %c0_13] : memref<1x284x4xbf16, #tpu.memory_space<vmem>>, vector<1x256x4xbf16>
    %13 = vector.shape_cast %12 : vector<1x256x4xbf16> to vector<256x4xbf16>
    %c0_14 = arith.constant 0 : index
    %c7 = arith.constant 7 : index
    %c0_15 = arith.constant 0 : index
    %14 = vector.load %arg1[%c0_14, %c7, %c0_15] : memref<1x284x4xbf16, #tpu.memory_space<vmem>>, vector<1x256x4xbf16>
    %15 = vector.shape_cast %14 : vector<1x256x4xbf16> to vector<256x4xbf16>
    %c0_16 = arith.constant 0 : index
    %c8 = arith.constant 8 : index
    %c0_17 = arith.constant 0 : index
    %16 = vector.load %arg1[%c0_16, %c8, %c0_17] : memref<1x284x4xbf16, #tpu.memory_space<vmem>>, vector<1x256x4xbf16>
    %17 = vector.shape_cast %16 : vector<1x256x4xbf16> to vector<256x4xbf16>
    %c0_18 = arith.constant 0 : index
    %c9 = arith.constant 9 : index
    %c0_19 = arith.constant 0 : index
    %18 = vector.load %arg1[%c0_18, %c9, %c0_19] : memref<1x284x4xbf16, #tpu.memory_space<vmem>>, vector<1x256x4xbf16>
    %19 = vector.shape_cast %18 : vector<1x256x4xbf16> to vector<256x4xbf16>
    %c0_20 = arith.constant 0 : index
    %c10 = arith.constant 10 : index
    %c0_21 = arith.constant 0 : index
    %20 = vector.load %arg1[%c0_20, %c10, %c0_21] : memref<1x284x4xbf16, #tpu.memory_space<vmem>>, vector<1x256x4xbf16>
    %21 = vector.shape_cast %20 : vector<1x256x4xbf16> to vector<256x4xbf16>
    %c0_22 = arith.constant 0 : index
    %c11 = arith.constant 11 : index
    %c0_23 = arith.constant 0 : index
    %22 = vector.load %arg1[%c0_22, %c11, %c0_23] : memref<1x284x4xbf16, #tpu.memory_space<vmem>>, vector<1x256x4xbf16>
    %23 = vector.shape_cast %22 : vector<1x256x4xbf16> to vector<256x4xbf16>
    %c0_24 = arith.constant 0 : index
    %c12 = arith.constant 12 : index
    %c0_25 = arith.constant 0 : index
    %24 = vector.load %arg1[%c0_24, %c12, %c0_25] : memref<1x284x4xbf16, #tpu.memory_space<vmem>>, vector<1x256x4xbf16>
    %25 = vector.shape_cast %24 : vector<1x256x4xbf16> to vector<256x4xbf16>
    %c0_26 = arith.constant 0 : index
    %c13 = arith.constant 13 : index
    %c0_27 = arith.constant 0 : index
    %26 = vector.load %arg1[%c0_26, %c13, %c0_27] : memref<1x284x4xbf16, #tpu.memory_space<vmem>>, vector<1x256x4xbf16>
    %27 = vector.shape_cast %26 : vector<1x256x4xbf16> to vector<256x4xbf16>
    %c0_28 = arith.constant 0 : index
    %c14 = arith.constant 14 : index
    %c0_29 = arith.constant 0 : index
    %28 = vector.load %arg1[%c0_28, %c14, %c0_29] : memref<1x284x4xbf16, #tpu.memory_space<vmem>>, vector<1x256x4xbf16>
    %29 = vector.shape_cast %28 : vector<1x256x4xbf16> to vector<256x4xbf16>
    %c0_30 = arith.constant 0 : index
    %c15 = arith.constant 15 : index
    %c0_31 = arith.constant 0 : index
    %30 = vector.load %arg1[%c0_30, %c15, %c0_31] : memref<1x284x4xbf16, #tpu.memory_space<vmem>>, vector<1x256x4xbf16>
    %31 = vector.shape_cast %30 : vector<1x256x4xbf16> to vector<256x4xbf16>
    %c0_32 = arith.constant 0 : index
    %c16 = arith.constant 16 : index
    %c0_33 = arith.constant 0 : index
    %32 = vector.load %arg1[%c0_32, %c16, %c0_33] : memref<1x284x4xbf16, #tpu.memory_space<vmem>>, vector<1x256x4xbf16>
    %33 = vector.shape_cast %32 : vector<1x256x4xbf16> to vector<256x4xbf16>
    %c0_34 = arith.constant 0 : index
    %c17 = arith.constant 17 : index
    %c0_35 = arith.constant 0 : index
    %34 = vector.load %arg1[%c0_34, %c17, %c0_35] : memref<1x284x4xbf16, #tpu.memory_space<vmem>>, vector<1x256x4xbf16>
    %35 = vector.shape_cast %34 : vector<1x256x4xbf16> to vector<256x4xbf16>
    %c0_36 = arith.constant 0 : index
    %c18 = arith.constant 18 : index
    %c0_37 = arith.constant 0 : index
    %36 = vector.load %arg1[%c0_36, %c18, %c0_37] : memref<1x284x4xbf16, #tpu.memory_space<vmem>>, vector<1x256x4xbf16>
    %37 = vector.shape_cast %36 : vector<1x256x4xbf16> to vector<256x4xbf16>
    %c0_38 = arith.constant 0 : index
    %c19 = arith.constant 19 : index
    %c0_39 = arith.constant 0 : index
    %38 = vector.load %arg1[%c0_38, %c19, %c0_39] : memref<1x284x4xbf16, #tpu.memory_space<vmem>>, vector<1x256x4xbf16>
    %39 = vector.shape_cast %38 : vector<1x256x4xbf16> to vector<256x4xbf16>
    %c0_40 = arith.constant 0 : index
    %c20 = arith.constant 20 : index
    %c0_41 = arith.constant 0 : index
    %40 = vector.load %arg1[%c0_40, %c20, %c0_41] : memref<1x284x4xbf16, #tpu.memory_space<vmem>>, vector<1x256x4xbf16>
    %41 = vector.shape_cast %40 : vector<1x256x4xbf16> to vector<256x4xbf16>
    %c0_42 = arith.constant 0 : index
    %c21 = arith.constant 21 : index
    %c0_43 = arith.constant 0 : index
    %42 = vector.load %arg1[%c0_42, %c21, %c0_43] : memref<1x284x4xbf16, #tpu.memory_space<vmem>>, vector<1x256x4xbf16>
    %43 = vector.shape_cast %42 : vector<1x256x4xbf16> to vector<256x4xbf16>
    %c0_44 = arith.constant 0 : index
    %c22 = arith.constant 22 : index
    %c0_45 = arith.constant 0 : index
    %44 = vector.load %arg1[%c0_44, %c22, %c0_45] : memref<1x284x4xbf16, #tpu.memory_space<vmem>>, vector<1x256x4xbf16>
    %45 = vector.shape_cast %44 : vector<1x256x4xbf16> to vector<256x4xbf16>
    %c0_46 = arith.constant 0 : index
    %c23 = arith.constant 23 : index
    %c0_47 = arith.constant 0 : index
    %46 = vector.load %arg1[%c0_46, %c23, %c0_47] : memref<1x284x4xbf16, #tpu.memory_space<vmem>>, vector<1x256x4xbf16>
    %47 = vector.shape_cast %46 : vector<1x256x4xbf16> to vector<256x4xbf16>
    %c0_48 = arith.constant 0 : index
    %c24 = arith.constant 24 : index
    %c0_49 = arith.constant 0 : index
    %48 = vector.load %arg1[%c0_48, %c24, %c0_49] : memref<1x284x4xbf16, #tpu.memory_space<vmem>>, vector<1x256x4xbf16>
    %49 = vector.shape_cast %48 : vector<1x256x4xbf16> to vector<256x4xbf16>
    %c0_50 = arith.constant 0 : index
    %c25 = arith.constant 25 : index
    %c0_51 = arith.constant 0 : index
    %50 = vector.load %arg1[%c0_50, %c25, %c0_51] : memref<1x284x4xbf16, #tpu.memory_space<vmem>>, vector<1x256x4xbf16>
    %51 = vector.shape_cast %50 : vector<1x256x4xbf16> to vector<256x4xbf16>
    %c0_52 = arith.constant 0 : index
    %c26 = arith.constant 26 : index
    %c0_53 = arith.constant 0 : index
    %52 = vector.load %arg1[%c0_52, %c26, %c0_53] : memref<1x284x4xbf16, #tpu.memory_space<vmem>>, vector<1x256x4xbf16>
    %53 = vector.shape_cast %52 : vector<1x256x4xbf16> to vector<256x4xbf16>
    %c0_54 = arith.constant 0 : index
    %c27 = arith.constant 27 : index
    %c0_55 = arith.constant 0 : index
    %54 = vector.load %arg1[%c0_54, %c27, %c0_55] : memref<1x284x4xbf16, #tpu.memory_space<vmem>>, vector<1x256x4xbf16>
    %55 = vector.shape_cast %54 : vector<1x256x4xbf16> to vector<256x4xbf16>
    %c0_56 = arith.constant 0 : index
    %c28 = arith.constant 28 : index
    %c0_57 = arith.constant 0 : index
    %56 = vector.load %arg1[%c0_56, %c28, %c0_57] : memref<1x284x4xbf16, #tpu.memory_space<vmem>>, vector<1x256x4xbf16>
    %57 = vector.shape_cast %56 : vector<1x256x4xbf16> to vector<256x4xbf16>
    %58 = tpu.concatenate %1, %3, %5, %7, %9, %11, %13, %15, %17, %19, %21, %23, %25, %27, %29, %31 in 1 : vector<256x4xbf16>, vector<256x4xbf16>, vector<256x4xbf16>, vector<256x4xbf16>, vector<256x4xbf16>, vector<256x4xbf16>, vector<256x4xbf16>, vector<256x4xbf16>, vector<256x4xbf16>, vector<256x4xbf16>, vector<256x4xbf16>, vector<256x4xbf16>, vector<256x4xbf16>, vector<256x4xbf16>, vector<256x4xbf16>, vector<256x4xbf16> -> vector<256x64xbf16>
    %59 = tpu.concatenate %33, %35, %37, %39, %41, %43, %45, %47, %49, %51, %53, %55, %57 in 1 : vector<256x4xbf16>, vector<256x4xbf16>, vector<256x4xbf16>, vector<256x4xbf16>, vector<256x4xbf16>, vector<256x4xbf16>, vector<256x4xbf16>, vector<256x4xbf16>, vector<256x4xbf16>, vector<256x4xbf16>, vector<256x4xbf16>, vector<256x4xbf16>, vector<256x4xbf16> -> vector<256x52xbf16>
    %60 = tpu.concatenate %58, %59 in 1 : vector<256x64xbf16>, vector<256x52xbf16> -> vector<256x116xbf16>
    %c0_58 = arith.constant 0 : index
    %c0_59 = arith.constant 0 : index
    %61 = vector.load %arg2[%c0_58, %c0_59] : memref<116x128xbf16, #tpu.memory_space<vmem>>, vector<116x128xbf16>
    %cst = arith.constant dense<0.000000e+00> : vector<256x128xf32>
    %62 = tpu.matmul %60, %61, %cst {dimension_numbers = #tpu.dot_dimension_numbers<[1], [0], [0], [1], [0, 0, 1, 1], [], []>} : vector<256x116xbf16>, vector<116x128xbf16>, vector<256x128xf32> -> vector<256x128xf32>
    %c0_60 = arith.constant 0 : index
    %c0_61 = arith.constant 0 : index
    %c0_62 = arith.constant 0 : index
    %63 = vector.load %arg3[%c0_60, %c0_61, %c0_62] : memref<1x2x128xf32, #tpu.memory_space<vmem>>, vector<1x2x128xf32>
    %64 = vector.shape_cast %63 : vector<1x2x128xf32> to vector<2x128xf32>
    %65 = vector.extract_strided_slice %64 {offsets = [0, 0], sizes = [1, 128], strides = [1, 1]} : vector<2x128xf32> to vector<1x128xf32>
    %66 = vector.broadcast %65 : vector<1x128xf32> to vector<256x128xf32>
    %67 = arith.subf %62, %66 : vector<256x128xf32>
    %68 = vector.extract_strided_slice %64 {offsets = [1, 0], sizes = [1, 128], strides = [1, 1]} : vector<2x128xf32> to vector<1x128xf32>
    %69 = vector.broadcast %68 : vector<1x128xf32> to vector<256x128xf32>
    %70 = arith.divf %67, %69 : vector<256x128xf32>
    %cst_63 = arith.constant 0.000000e+00 : f32
    %71 = vector.broadcast %cst_63 : f32 to vector<256x128xf32>
    %72 = arith.maximumf %70, %71 : vector<256x128xf32>
    %73 = arith.truncf %72 : vector<256x128xf32> to vector<256x128xbf16>
    %c0_64 = arith.constant 0 : index
    %c0_65 = arith.constant 0 : index
    %c0_66 = arith.constant 0 : index
    %74 = vector.load %arg4[%c0_64, %c0_65, %c0_66] : memref<1x256x128xbf16, #tpu.memory_space<vmem>>, vector<1x256x128xbf16>
    %75 = vector.shape_cast %74 : vector<1x256x128xbf16> to vector<256x128xbf16>
    %76 = vector.shape_cast %73 : vector<256x128xbf16> to vector<1x256x128xbf16>
    tpu.vector_store %arg4[%c0_64, %c0_65, %c0_66], %76 {strides = array<i32>} : memref<1x256x128xbf16, #tpu.memory_space<vmem>>, vector<1x256x128xbf16>,
    return
  }
  func.func @transform_0(%arg0: i32) -> (i32, i32, i32) {
    %c0_i32 = arith.constant 0 : i32
    %c0_i32_0 = arith.constant 0 : i32
    %c0_i32_1 = arith.constant 0 : i32
    return %arg0, %c0_i32, %c0_i32_0 : i32, i32, i32
  }
  func.func @transform_1(%arg0: i32) -> (i32, i32) {
    %c0_i32 = arith.constant 0 : i32
    %c0_i32_0 = arith.constant 0 : i32
    %c0_i32_1 = arith.constant 0 : i32
    return %c0_i32, %c0_i32_0 : i32, i32
  }
  func.func @transform_2(%arg0: i32) -> (i32, i32, i32) {
    %c0_i32 = arith.constant 0 : i32
    %c0_i32_0 = arith.constant 0 : i32
    %c0_i32_1 = arith.constant 0 : i32
    return %arg0, %c0_i32, %c0_i32_0 : i32, i32, i32
  }
  func.func @transform_3(%arg0: i32) -> (i32, i32, i32) {
    %c0_i32 = arith.constant 0 : i32
    %c0_i32_0 = arith.constant 0 : i32
    %c0_i32_1 = arith.constant 0 : i32
    return %arg0, %c0_i32, %c0_i32_0 : i32, i32, i32
  }
}

</mosaic_0001>

<llo_original>
// kernel: tpu_custom_call.1
$region0: #{tpu_custom_call.1}
  #allocation0 [shape = 'u32[]', space=smem, size = 0x4, offset = 0x4, fixed_abs, tag = 'smem constant byte address 0x4 - core index']
  #allocation1 [shape = 'u32[144,128]{1,0:T(1,128)}', space=vmem, size = 0x12000, scoped, tag = 'internal scratch']
  %s0 = inlined_call_operand.vmem [shape: bf16[2,284,4], index: 0, kind: input, shape index: {}]
  %s1 = inlined_call_operand.vmem [shape: bf16[116,128], index: 1, kind: input, shape index: {}]
  %s2 = inlined_call_operand.vmem [shape: f32[2,2,128], index: 2, kind: input, shape index: {}]
  %s3 = inlined_call_operand.hbm [shape: bf16[2,256,128], index: 3, kind: output, shape index: {}]
  %s4 = sld [smem:[#allocation0]]
  $region45: #{tpu_custom_call.1} parent=0
    _
  %s6 = ssub.s32 1, %s4
  %s7 = scalar_select 0, %s6, %s4
  $region1: #{tpu_custom_call.1} parent=0
    #allocation2 [shape = 'u8[131072]{0}', space=vmem, size = 0x20000, scoped, tag = 'output window, operand 0']
    #allocation3 [shape = 's32[2]{0}', space=sflag, size = 0x8, scoped, tag = 'scoped memory for tpu_custom_call.1']
    %8 = vsyncpa [#allocation3], 0
    %s9 = scalar_lea.sflag [#allocation3], 1
    %10 = vsyncpa %s9, 0
    loop: start=0, step=1, limit=4
    $region2: #{tpu_custom_call.1} parent=1 // loop_pre_header
      _
    $region3: #{tpu_custom_call.1} parent=1 // loop_header
      %s12 = sphi 0, %s16
      %p13 = scmp.ge.s32.totalorder %s12, 4
      %s22 = sphi 0, %s24
      %s25 = sphi 0, %s22
      %s26 = sphi 0, %s25
      %s42 = sphi 0, %s26
      %s46 = sphi 0, %s46
      %s48 = sphi 0, %s46
      %s49 = sphi 0, %s48
      %s63 = sphi 0, %s49
      %s69 = sphi 0, %s71
      %s72 = sphi 0, %s69
      %s73 = sphi 0, %s72
      %s89 = sphi 0, %s73
      %s95 = sphi 0, %s97
      %s98 = sphi 0, %s95
      %s99 = sphi 0, %s98
      %s115 = sphi 0, %s99
    $region4: #{tpu_custom_call.1} parent=1 // loop_header_branch
      %15 = sbr.rel (%p13) target = $region8
    $region5: #{tpu_custom_call.1} parent=1 // loop_body
      %s17 = ssub.s32 %s12, 1
      %s18 = ssub.s32 %s12, 2
      %s19 = sadd.s32 %s12, 1
      %s20 = ssub.s32 %s12, %s19
      %p21 = scmp.eq.s32.totalorder %s20, 0
      %s23 = sadd.s32 %s22, 1
      %s24 = scalar_select %p21, %s22, %s23
      %p27 = pneg %p21
      %p28 = scmp.eq.s32.totalorder %s12, 1
      %p29 = por %p27, %p28
      %p30 = scmp.ne.s32.totalorder %s22, %s25
      %p31 = scmp.eq.s32.totalorder %s12, 0
      %p32 = por %p30, %p31
      %p33 = scmp.ne.s32.totalorder %s22, %s25
      %p34 = scmp.eq.s32.totalorder %s17, 1
      %p35 = por %p33, %p34
      %p36 = scmp.ne.s32.totalorder %s25, %s26
      %p37 = scmp.eq.s32.totalorder %s17, 0
      %p38 = por %p36, %p37
      %p39 = scmp.ne.s32.totalorder %s25, %s26
      %p40 = scmp.eq.s32.totalorder %s18, 1
      %p41 = por %p39, %p40
      %p43 = scmp.ne.s32.totalorder %s26, %s42
      %p44 = scmp.eq.s32.totalorder %s18, 0
      %p45 = por %p43, %p44
      %s47 = sadd.s32 %s46, 1
      %p50 = scmp.eq.s32.totalorder %s12, 1
      %p51 = scmp.ne.s32.totalorder %s46, %s48
      %p52 = scmp.eq.s32.totalorder %s12, 0
      %p53 = por %p51, %p52
      %p54 = scmp.ne.s32.totalorder %s46, %s48
      %p55 = scmp.eq.s32.totalorder %s17, 1
      %p56 = por %p54, %p55
      %p57 = scmp.ne.s32.totalorder %s48, %s49
      %p58 = scmp.eq.s32.totalorder %s17, 0
      %p59 = por %p57, %p58
      %p60 = scmp.ne.s32.totalorder %s48, %s49
      %p61 = scmp.eq.s32.totalorder %s18, 1
      %p62 = por %p60, %p61
      %p64 = scmp.ne.s32.totalorder %s49, %s63
      %p65 = scmp.eq.s32.totalorder %s18, 0
      %p66 = por %p64, %p65
      %s67 = ssub.s32 %s12, %s19
      %p68 = scmp.eq.s32.totalorder %s67, 0
      %s70 = sadd.s32 %s69, 1
      %s71 = scalar_select %p68, %s69, %s70
      %p74 = pneg %p68
      %p75 = scmp.eq.s32.totalorder %s12, 1
      %p76 = por %p74, %p75
      %p77 = scmp.ne.s32.totalorder %s69, %s72
      %p78 = scmp.eq.s32.totalorder %s12, 0
      %p79 = por %p77, %p78
      %p80 = scmp.ne.s32.totalorder %s69, %s72
      %p81 = scmp.eq.s32.totalorder %s17, 1
      %p82 = por %p80, %p81
      %p83 = scmp.ne.s32.totalorder %s72, %s73
      %p84 = scmp.eq.s32.totalorder %s17, 0
      %p85 = por %p83, %p84
      %p86 = scmp.ne.s32.totalorder %s72, %s73
      %p87 = scmp.eq.s32.totalorder %s18, 1
      %p88 = por %p86, %p87
      %p90 = scmp.ne.s32.totalorder %s73, %s89
      %p91 = scmp.eq.s32.totalorder %s18, 0
      %p92 = por %p90, %p91
      %s93 = ssub.s32 %s12, %s19
      %p94 = scmp.eq.s32.totalorder %s93, 0
      %s96 = sadd.s32 %s95, 1
      %s97 = scalar_select %p94, %s95, %s96
      %p100 = pneg %p94
      %p101 = scmp.eq.s32.totalorder %s12, 1
      %p102 = por %p100, %p101
      %p103 = scmp.ne.s32.totalorder %s95, %s98
      %p104 = scmp.eq.s32.totalorder %s12, 0
      %p105 = por %p103, %p104
      %p106 = scmp.ne.s32.totalorder %s95, %s98
      %p107 = scmp.eq.s32.totalorder %s17, 1
      %p108 = por %p106, %p107
      %p109 = scmp.ne.s32.totalorder %s98, %s99
      %p110 = scmp.eq.s32.totalorder %s17, 0
      %p111 = por %p109, %p110
      %p112 = scmp.ne.s32.totalorder %s98, %s99
      %p113 = scmp.eq.s32.totalorder %s18, 1
      %p114 = por %p112, %p113
      %p116 = scmp.ne.s32.totalorder %s99, %s115
      %p117 = scmp.eq.s32.totalorder %s18, 0
      %p118 = por %p116, %p117
      %p119 = scmp.le.s32.totalorder 1, %s12
      %p120 = scmp.lt.s32.totalorder %s12, 3
      %p121 = pnand %p119, %p120
      %p122 = pneg %p121
      // Predicated region
      $region9: #{tpu_custom_call.1} parent=5 // pred_check
        _
      $region10: #{tpu_custom_call.1} parent=5 // pred_check_branch
        %124 = sbr.rel (%p121) target = $region12
      $region11: #{tpu_custom_call.1} parent=5 // pred_region
        %s125 = ssub.s32 %s12, 1
        // Predicated region
        $region13: #{tpu_custom_call.1} parent=11 // pred_check
          %p126 = pneg %p59
        $region14: #{tpu_custom_call.1} parent=11 // pred_check_branch
          %128 = sbr.rel (%p126) target = $region16
        $region15: #{tpu_custom_call.1} parent=11 // pred_region
          _
        $region16: #{tpu_custom_call.1} parent=11 // pred_fallthru
          _
      $region12: #{tpu_custom_call.1} parent=5 // pred_fallthru
        _
      %p129 = scmp.lt.s32.totalorder %s12, 2
      // Predicated region
      $region17: #{tpu_custom_call.1} parent=5 // pred_check
        %p130 = pneg %p129
      $region18: #{tpu_custom_call.1} parent=5 // pred_check_branch
        %132 = sbr.rel (%p130) target = $region20
      $region19: #{tpu_custom_call.1} parent=5 // pred_region
        // Predicated region
        $region21: #{tpu_custom_call.1} parent=19 // pred_check
          %p133 = pneg %p32
        $region22: #{tpu_custom_call.1} parent=19 // pred_check_branch
          %135 = sbr.rel (%p133) target = $region24
        $region23: #{tpu_custom_call.1} parent=19 // pred_region
          %p136 = scmp.lt.s32.totalorder %s12, 1
          %s137 = scalar_select %p136, %s12, 1
          %s138 = smul.addr %s137, 36
          %s139 = smul.addr %s138, 4
          %s140 = scalar_lea.vmem %s0, %s139
        $region24: #{tpu_custom_call.1} parent=19 // pred_fallthru
          _
        // Predicated region
        $region25: #{tpu_custom_call.1} parent=19 // pred_check
          %p141 = pneg %p79
        $region26: #{tpu_custom_call.1} parent=19 // pred_check_branch
          %143 = sbr.rel (%p141) target = $region28
        $region27: #{tpu_custom_call.1} parent=19 // pred_region
          %p144 = scmp.lt.s32.totalorder %s12, 1
          %s145 = scalar_select %p144, %s12, 1
          %s146 = smul.addr %s145, 2
          %s147 = scalar_lea.vmem %s2, %s146
        $region28: #{tpu_custom_call.1} parent=19 // pred_fallthru
          _
      $region20: #{tpu_custom_call.1} parent=5 // pred_fallthru
        _
      %p148 = scmp.le.s32.totalorder 1, %s12
      %p149 = scmp.lt.s32.totalorder %s12, 3
      %p150 = pnand %p148, %p149
      %p151 = pneg %p150
      // Predicated region
      $region29: #{tpu_custom_call.1} parent=5 // pred_check
        _
      $region30: #{tpu_custom_call.1} parent=5 // pred_check_branch
        %153 = sbr.rel (%p150) target = $region32
      $region31: #{tpu_custom_call.1} parent=5 // pred_region
        %s154 = ssub.s32 %s12, 1
        %p155 = scmp.lt.s32.totalorder %s17, 1
        %s156 = scalar_select %p155, %s17, 1
        %s157 = smul.addr %s156, 36
        %s158 = smul.addr %s157, 4
        %s159 = scalar_lea.vmem %s0, %s158
        %p160 = pneg %p38
        %p161 = pneg %p35
        %p162 = pneg %p59
        %p163 = pneg %p56
        %p164 = scmp.lt.s32.totalorder %s17, 1
        %s165 = scalar_select %p164, %s17, 1
        %s166 = smul.addr %s165, 2
        %s167 = scalar_lea.vmem %s2, %s166
        %p168 = pneg %p85
        %p169 = pneg %p82
        %p170 = pneg %p111
        %p171 = pneg %p108
        %s172 = sand.u32 %s98, 1
        %s173 = scalar_lea.sflag [#allocation3], %s172
        %s174 = sand.u32 %s98, 1
        %s175 = smul.addr %s174, 128
        %s176 = scalar_lea.vmem [#allocation2], %s175
        %p177 = scmp.lt.s32.totalorder %s17, 1
        %s178 = scalar_select %p177, %s17, 1
        %s179 = smul.addr %s178, 36
        %s180 = smul.addr %s179, 4
        %s181 = scalar_lea.vmem %s0, %s180
        %p182 = scmp.lt.s32.totalorder %s17, 1
        %s183 = scalar_select %p182, %s17, 1
        %s184 = smul.addr %s183, 2
        %s185 = scalar_lea.vmem %s2, %s184
        %v187 = vld [vmem:[%s181] sm:$0xf]
        %v188 = vld [vmem:[%s181 + $0x4] sm:$0xf]
        %v189 = vld [vmem:[%s181 + $0x8] sm:$0xf]
        %v190 = vld [vmem:[%s181 + $0xc] sm:$0xf]
        %v191 = vld [vmem:[%s181 + $0x10] sm:$0xf]
        %v192 = vld [vmem:[%s181 + $0x14] sm:$0xf]
        %v193 = vld [vmem:[%s181 + $0x18] sm:$0xf]
        %v194 = vld [vmem:[%s181 + $0x1c] sm:$0xf]
        %v195 = vld [vmem:[%s181 + $0x20] sm:$0xf]
        %v196 = vld [vmem:[%s181 + $0x24] sm:$0xf]
        %v197 = vld [vmem:[%s181 + $0x28] sm:$0xf]
        %v198 = vld [vmem:[%s181 + $0x2c] sm:$0xf]
        %v199 = vld [vmem:[%s181 + $0x30] sm:$0xf]
        %v200 = vld [vmem:[%s181 + $0x34] sm:$0xf]
        %v201 = vld [vmem:[%s181 + $0x38] sm:$0xf]
        %v202 = vld [vmem:[%s181 + $0x3c] sm:$0xf]
        %v203 = vld [vmem:[%s181 + $0x40] sm:$0xf]
        %v204 = vld [vmem:[%s181 + $0x44] sm:$0xf]
        %v205 = vld [vmem:[%s181 + $0x48] sm:$0xf]
        %v206 = vld [vmem:[%s181 + $0x4c] sm:$0xf]
        %v207 = vld [vmem:[%s181 + $0x50] sm:$0xf]
        %v208 = vld [vmem:[%s181 + $0x54] sm:$0xf]
        %v209 = vld [vmem:[%s181 + $0x58] sm:$0xf]
        %v210 = vld [vmem:[%s181 + $0x5c] sm:$0xf]
        %v211 = vld [vmem:[%s181 + $0x60] sm:$0xf]
        %v212 = vld [vmem:[%s181 + $0x64] sm:$0xf]
        %v213 = vld [vmem:[%s181 + $0x68] sm:$0xf]
        %v214 = vld [vmem:[%s181 + $0x6c] sm:$0xf]
        %v215 = vld [vmem:[%s181 + $0x70] sm:$0xf]
        %v216 = vld [vmem:[%s181 + $0x74] sm:$0xf]
        %v217 = vld [vmem:[%s181 + $0x78] sm:$0xf]
        %v218 = vld [vmem:[%s181 + $0x7c] sm:$0xf]
        %v219 = vld [vmem:[%s181 + $0x80] sm:$0x1]
        %v220 = vld [vmem:[%s181] sm:$0xe]
        %v221 = vld [vmem:[%s181 + $0x80] sm:$0x3]
        %v222 = vld [vmem:[%s181] sm:$0xc]
        %v223 = vld [vmem:[%s181 + $0x80] sm:$0x7]
        %v224 = vld [vmem:[%s181] sm:$0x8]
        %v225 = vld [vmem:[%s181 + $0x80] sm:$0xf]
        %v226 = vld [vmem:[%s181 + $0x84] sm:$0x1]
        %v227 = vld [vmem:[%s181 + $0x4] sm:$0xe]
        %v228 = vld [vmem:[%s181 + $0x84] sm:$0x3]
        %v229 = vld [vmem:[%s181 + $0x4] sm:$0xc]
        %v230 = vld [vmem:[%s181 + $0x84] sm:$0x7]
        %v231 = vld [vmem:[%s181 + $0x4] sm:$0x8]
        %v232 = vld [vmem:[%s181 + $0x84] sm:$0xf]
        %v233 = vld [vmem:[%s181 + $0x88] sm:$0x1]
        %v234 = vld [vmem:[%s181 + $0x8] sm:$0xe]
        %v235 = vld [vmem:[%s181 + $0x88] sm:$0x3]
        %v236 = vld [vmem:[%s181 + $0x8] sm:$0xc]
        %v237 = vld [vmem:[%s181 + $0x88] sm:$0x7]
        %v238 = vld [vmem:[%s181 + $0x8] sm:$0x8]
        %v239 = vld [vmem:[%s181 + $0x88] sm:$0xf]
        %v240 = vld [vmem:[%s181 + $0x8c] sm:$0x1]
        %v241 = vld [vmem:[%s181 + $0xc] sm:$0xe]
        %v242 = vld [vmem:[%s181 + $0x8c] sm:$0x3]
        %v243 = vld [vmem:[%s181 + $0xc] sm:$0xc]
        %v276 = vunpack.c.l.b16 %v187
        %v277 = vunpack.c.l.b16 %v188
        %v278 = vunpack.c.l.b16 %v189
        %v279 = vunpack.c.l.b16 %v190
        %v280 = vunpack.c.l.b16 %v191
        %v281 = vunpack.c.l.b16 %v192
        %v282 = vunpack.c.l.b16 %v193
        %v283 = vunpack.c.l.b16 %v194
        %v284 = vunpack.c.l.b16 %v195
        %v285 = vunpack.c.l.b16 %v196
        %v286 = vunpack.c.l.b16 %v197
        %v287 = vunpack.c.l.b16 %v198
        %v288 = vunpack.c.l.b16 %v199
        %v289 = vunpack.c.l.b16 %v200
        %v290 = vunpack.c.l.b16 %v201
        %v291 = vunpack.c.l.b16 %v202
        %v292 = vunpack.c.l.b16 %v203
        %v293 = vunpack.c.l.b16 %v204
        %v294 = vunpack.c.l.b16 %v205
        %v295 = vunpack.c.l.b16 %v206
        %v296 = vunpack.c.l.b16 %v207
        %v297 = vunpack.c.l.b16 %v208
        %v298 = vunpack.c.l.b16 %v209
        %v299 = vunpack.c.l.b16 %v210
        %v300 = vunpack.c.l.b16 %v211
        %v301 = vunpack.c.l.b16 %v212
        %v302 = vunpack.c.l.b16 %v213
        %v303 = vunpack.c.l.b16 %v214
        %v304 = vunpack.c.l.b16 %v215
        %v305 = vunpack.c.l.b16 %v216
        %v306 = vunpack.c.l.b16 %v217
        %v307 = vunpack.c.l.b16 %v218
        %v308 = vpack.c.b16 %v277, %v276
        %v309 = vpack.c.b16 %v279, %v278
        %v310 = vpack.c.b16 %v281, %v280
        %v311 = vpack.c.b16 %v283, %v282
        %v312 = vpack.c.b16 %v285, %v284
        %v313 = vpack.c.b16 %v287, %v286
        %v314 = vpack.c.b16 %v289, %v288
        %v315 = vpack.c.b16 %v291, %v290
        %v316 = vpack.c.b16 %v293, %v292
        %v317 = vpack.c.b16 %v295, %v294
        %v318 = vpack.c.b16 %v297, %v296
        %v319 = vpack.c.b16 %v299, %v298
        %v320 = vpack.c.b16 %v301, %v300
        %v321 = vpack.c.b16 %v303, %v302
        %v322 = vpack.c.b16 %v305, %v304
        %v323 = vpack.c.b16 %v307, %v306
        %v325 = vunpack.c.l.b16 %v219
        %v326 = vpack.c.b16 %v325, %v325
        %vm327 = vsmask.f32 7424
        %v329 = vshrl.u32 %v308, 16
        %v331 = vshll.u32 %v308, 16
        %v333 = vrot.slane %v331, 1
        %v334 = vor.u32 %v329, %v333
        %v336 = vshll.u32 %v309, 16
        %v338 = vrot.slane %v336, 1
        %v339 = vsel %vm327, %v334, %v338
        %v340 = vshrl.u32 %v309, 16
        %v342 = vor.u32 %v340, %v338
        %v344 = vshll.u32 %v310, 16
        %v346 = vrot.slane %v344, 1
        %v347 = vsel %vm327, %v342, %v346
        %v348 = vshrl.u32 %v310, 16
        %v350 = vor.u32 %v348, %v346
        %v352 = vshll.u32 %v311, 16
        %v354 = vrot.slane %v352, 1
        %v355 = vsel %vm327, %v350, %v354
        %v356 = vshrl.u32 %v311, 16
        %v358 = vor.u32 %v356, %v354
        %v360 = vshll.u32 %v312, 16
        %v362 = vrot.slane %v360, 1
        %v363 = vsel %vm327, %v358, %v362
        %v364 = vshrl.u32 %v312, 16
        %v366 = vor.u32 %v364, %v362
        %v368 = vshll.u32 %v313, 16
        %v370 = vrot.slane %v368, 1
        %v371 = vsel %vm327, %v366, %v370
        %v372 = vshrl.u32 %v313, 16
        %v374 = vor.u32 %v372, %v370
        %v376 = vshll.u32 %v314, 16
        %v378 = vrot.slane %v376, 1
        %v379 = vsel %vm327, %v374, %v378
        %v380 = vshrl.u32 %v314, 16
        %v382 = vor.u32 %v380, %v378
        %v384 = vshll.u32 %v315, 16
        %v386 = vrot.slane %v384, 1
        %v387 = vsel %vm327, %v382, %v386
        %v388 = vshrl.u32 %v315, 16
        %v390 = vor.u32 %v388, %v386
        %v392 = vshll.u32 %v316, 16
        %v394 = vrot.slane %v392, 1
        %v395 = vsel %vm327, %v390, %v394
        %v396 = vshrl.u32 %v316, 16
        %v398 = vor.u32 %v396, %v394
        %v400 = vshll.u32 %v317, 16
        %v402 = vrot.slane %v400, 1
        %v403 = vsel %vm327, %v398, %v402
        %v404 = vshrl.u32 %v317, 16
        %v406 = vor.u32 %v404, %v402
        %v408 = vshll.u32 %v318, 16
        %v410 = vrot.slane %v408, 1
        %v411 = vsel %vm327, %v406, %v410
        %v412 = vshrl.u32 %v318, 16
        %v414 = vor.u32 %v412, %v410
        %v416 = vshll.u32 %v319, 16
        %v418 = vrot.slane %v416, 1
        %v419 = vsel %vm327, %v414, %v418
        %v420 = vshrl.u32 %v319, 16
        %v422 = vor.u32 %v420, %v418
        %v424 = vshll.u32 %v320, 16
        %v426 = vrot.slane %v424, 1
        %v427 = vsel %vm327, %v422, %v426
        %v428 = vshrl.u32 %v320, 16
        %v430 = vor.u32 %v428, %v426
        %v432 = vshll.u32 %v321, 16
        %v434 = vrot.slane %v432, 1
        %v435 = vsel %vm327, %v430, %v434
        %v436 = vshrl.u32 %v321, 16
        %v438 = vor.u32 %v436, %v434
        %v440 = vshll.u32 %v322, 16
        %v442 = vrot.slane %v440, 1
        %v443 = vsel %vm327, %v438, %v442
        %v444 = vshrl.u32 %v322, 16
        %v446 = vor.u32 %v444, %v442
        %v448 = vshll.u32 %v323, 16
        %v450 = vrot.slane %v448, 1
        %v451 = vsel %vm327, %v446, %v450
        %v452 = vshrl.u32 %v323, 16
        %v454 = vor.u32 %v452, %v450
        %v456 = vshll.u32 %v326, 16
        %v458 = vrot.slane %v456, 1
        %v459 = vsel %vm327, %v454, %v458
        %460 = vrot.lane.b32.xlu0 %v339, 4
        %v461 = vpop.permute.xlu0 %460
        %462 = vrot.lane.b32.xlu0 %v347, 4
        %v463 = vpop.permute.xlu0 %462
        %464 = vrot.lane.b32.xlu0 %v355, 4
        %v465 = vpop.permute.xlu0 %464
        %466 = vrot.lane.b32.xlu0 %v363, 4
        %v467 = vpop.permute.xlu0 %466
        %468 = vrot.lane.b32.xlu0 %v371, 4
        %v469 = vpop.permute.xlu0 %468
        %470 = vrot.lane.b32.xlu0 %v379, 4
        %v471 = vpop.permute.xlu0 %470
        %472 = vrot.lane.b32.xlu0 %v387, 4
        %v473 = vpop.permute.xlu0 %472
        %474 = vrot.lane.b32.xlu0 %v395, 4
        %v475 = vpop.permute.xlu0 %474
        %476 = vrot.lane.b32.xlu0 %v403, 4
        %v477 = vpop.permute.xlu0 %476
        %478 = vrot.lane.b32.xlu0 %v411, 4
        %v479 = vpop.permute.xlu0 %478
        %480 = vrot.lane.b32.xlu0 %v419, 4
        %v481 = vpop.permute.xlu0 %480
        %482 = vrot.lane.b32.xlu0 %v427, 4
        %v483 = vpop.permute.xlu0 %482
        %484 = vrot.lane.b32.xlu0 %v435, 4
        %v485 = vpop.permute.xlu0 %484
        %486 = vrot.lane.b32.xlu0 %v443, 4
        %v487 = vpop.permute.xlu0 %486
        %488 = vrot.lane.b32.xlu0 %v451, 4
        %v489 = vpop.permute.xlu0 %488
        %490 = vrot.lane.b32.xlu0 %v459, 4
        %v491 = vpop.permute.xlu0 %490
        %v493 = vunpack.c.l.b16 %v220
        %v494 = vpack.c.b16 %v277, %v493
        %vm495 = vcmask 1046528
        %v496 = vrot.slane %v494, 1
        %v497 = vrot.slane %v309, 1
        %v498 = vsel %vm495, %v496, %v497
        %v499 = vrot.slane %v310, 1
        %v500 = vsel %vm495, %v497, %v499
        %v501 = vrot.slane %v311, 1
        %v502 = vsel %vm495, %v499, %v501
        %v503 = vrot.slane %v312, 1
        %v504 = vsel %vm495, %v501, %v503
        %v505 = vrot.slane %v313, 1
        %v506 = vsel %vm495, %v503, %v505
        %v507 = vrot.slane %v314, 1
        %v508 = vsel %vm495, %v505, %v507
        %v509 = vrot.slane %v315, 1
        %v510 = vsel %vm495, %v507, %v509
        %v511 = vrot.slane %v316, 1
        %v512 = vsel %vm495, %v509, %v511
        %v513 = vrot.slane %v317, 1
        %v514 = vsel %vm495, %v511, %v513
        %v515 = vrot.slane %v318, 1
        %v516 = vsel %vm495, %v513, %v515
        %v517 = vrot.slane %v319, 1
        %v518 = vsel %vm495, %v515, %v517
        %v519 = vrot.slane %v320, 1
        %v520 = vsel %vm495, %v517, %v519
        %v521 = vrot.slane %v321, 1
        %v522 = vsel %vm495, %v519, %v521
        %v523 = vrot.slane %v322, 1
        %v524 = vsel %vm495, %v521, %v523
        %v525 = vrot.slane %v323, 1
        %v526 = vsel %vm495, %v523, %v525
        %v527 = vrot.slane %v326, 1
        %v528 = vsel %vm495, %v525, %v527
        %529 = vrot.lane.b32.xlu0 %v498, 8
        %v530 = vpop.permute.xlu0 %529
        %531 = vrot.lane.b32.xlu0 %v500, 8
        %v532 = vpop.permute.xlu0 %531
        %533 = vrot.lane.b32.xlu0 %v502, 8
        %v534 = vpop.permute.xlu0 %533
        %535 = vrot.lane.b32.xlu0 %v504, 8
        %v536 = vpop.permute.xlu0 %535
        %537 = vrot.lane.b32.xlu0 %v506, 8
        %v538 = vpop.permute.xlu0 %537
        %539 = vrot.lane.b32.xlu0 %v508, 8
        %v540 = vpop.permute.xlu0 %539
        %541 = vrot.lane.b32.xlu0 %v510, 8
        %v542 = vpop.permute.xlu0 %541
        %543 = vrot.lane.b32.xlu0 %v512, 8
        %v544 = vpop.permute.xlu0 %543
        %545 = vrot.lane.b32.xlu0 %v514, 8
        %v546 = vpop.permute.xlu0 %545
        %547 = vrot.lane.b32.xlu0 %v516, 8
        %v548 = vpop.permute.xlu0 %547
        %549 = vrot.lane.b32.xlu0 %v518, 8
        %v550 = vpop.permute.xlu0 %549
        %551 = vrot.lane.b32.xlu0 %v520, 8
        %v552 = vpop.permute.xlu0 %551
        %553 = vrot.lane.b32.xlu0 %v522, 8
        %v554 = vpop.permute.xlu0 %553
        %555 = vrot.lane.b32.xlu0 %v524, 8
        %v556 = vpop.permute.xlu0 %555
        %557 = vrot.lane.b32.xlu0 %v526, 8
        %v558 = vpop.permute.xlu0 %557
        %559 = vrot.lane.b32.xlu0 %v528, 8
        %v560 = vpop.permute.xlu0 %559
        %v562 = vunpack.c.l.b16 %v221
        %v563 = vpack.c.b16 %v562, %v562
        %vm564 = vsmask.f32 6400
        %v566 = vshrl.u32 %v494, 16
        %v568 = vrot.slane %v566, 1
        %v569 = vshll.u32 %v494, 16
        %v571 = vrot.slane %v569, 2
        %v572 = vor.u32 %v568, %v571
        %v573 = vrot.slane %v340, 1
        %v574 = vrot.slane %v336, 2
        %v575 = vor.u32 %v573, %v574
        %v576 = vsel %vm564, %v572, %v575
        %v577 = vrot.slane %v348, 1
        %v578 = vrot.slane %v344, 2
        %v579 = vor.u32 %v577, %v578
        %v580 = vsel %vm564, %v575, %v579
        %v581 = vrot.slane %v356, 1
        %v582 = vrot.slane %v352, 2
        %v583 = vor.u32 %v581, %v582
        %v584 = vsel %vm564, %v579, %v583
        %v585 = vrot.slane %v364, 1
        %v586 = vrot.slane %v360, 2
        %v587 = vor.u32 %v585, %v586
        %v588 = vsel %vm564, %v583, %v587
        %v589 = vrot.slane %v372, 1
        %v590 = vrot.slane %v368, 2
        %v591 = vor.u32 %v589, %v590
        %v592 = vsel %vm564, %v587, %v591
        %v593 = vrot.slane %v380, 1
        %v594 = vrot.slane %v376, 2
        %v595 = vor.u32 %v593, %v594
        %v596 = vsel %vm564, %v591, %v595
        %v597 = vrot.slane %v388, 1
        %v598 = vrot.slane %v384, 2
        %v599 = vor.u32 %v597, %v598
        %v600 = vsel %vm564, %v595, %v599
        %v601 = vrot.slane %v396, 1
        %v602 = vrot.slane %v392, 2
        %v603 = vor.u32 %v601, %v602
        %v604 = vsel %vm564, %v599, %v603
        %v605 = vrot.slane %v404, 1
        %v606 = vrot.slane %v400, 2
        %v607 = vor.u32 %v605, %v606
        %v608 = vsel %vm564, %v603, %v607
        %v609 = vrot.slane %v412, 1
        %v610 = vrot.slane %v408, 2
        %v611 = vor.u32 %v609, %v610
        %v612 = vsel %vm564, %v607, %v611
        %v613 = vrot.slane %v420, 1
        %v614 = vrot.slane %v416, 2
        %v615 = vor.u32 %v613, %v614
        %v616 = vsel %vm564, %v611, %v615
        %v617 = vrot.slane %v428, 1
        %v618 = vrot.slane %v424, 2
        %v619 = vor.u32 %v617, %v618
        %v620 = vsel %vm564, %v615, %v619
        %v621 = vrot.slane %v436, 1
        %v622 = vrot.slane %v432, 2
        %v623 = vor.u32 %v621, %v622
        %v624 = vsel %vm564, %v619, %v623
        %v625 = vrot.slane %v444, 1
        %v626 = vrot.slane %v440, 2
        %v627 = vor.u32 %v625, %v626
        %v628 = vsel %vm564, %v623, %v627
        %v629 = vrot.slane %v452, 1
        %v630 = vrot.slane %v448, 2
        %v631 = vor.u32 %v629, %v630
        %v632 = vsel %vm564, %v627, %v631
        %v634 = vshrl.u32 %v563, 16
        %v636 = vrot.slane %v634, 1
        %v637 = vshll.u32 %v563, 16
        %v639 = vrot.slane %v637, 2
        %v640 = vor.u32 %v636, %v639
        %v641 = vsel %vm564, %v631, %v640
        %642 = vrot.lane.b32.xlu0 %v576, 12
        %v643 = vpop.permute.xlu0 %642
        %644 = vrot.lane.b32.xlu0 %v580, 12
        %v645 = vpop.permute.xlu0 %644
        %646 = vrot.lane.b32.xlu0 %v584, 12
        %v647 = vpop.permute.xlu0 %646
        %648 = vrot.lane.b32.xlu0 %v588, 12
        %v649 = vpop.permute.xlu0 %648
        %650 = vrot.lane.b32.xlu0 %v592, 12
        %v651 = vpop.permute.xlu0 %650
        %652 = vrot.lane.b32.xlu0 %v596, 12
        %v653 = vpop.permute.xlu0 %652
        %654 = vrot.lane.b32.xlu0 %v600, 12
        %v655 = vpop.permute.xlu0 %654
        %656 = vrot.lane.b32.xlu0 %v604, 12
        %v657 = vpop.permute.xlu0 %656
        %658 = vrot.lane.b32.xlu0 %v608, 12
        %v659 = vpop.permute.xlu0 %658
        %660 = vrot.lane.b32.xlu0 %v612, 12
        %v661 = vpop.permute.xlu0 %660
        %662 = vrot.lane.b32.xlu0 %v616, 12
        %v663 = vpop.permute.xlu0 %662
        %664 = vrot.lane.b32.xlu0 %v620, 12
        %v665 = vpop.permute.xlu0 %664
        %666 = vrot.lane.b32.xlu0 %v624, 12
        %v667 = vpop.permute.xlu0 %666
        %668 = vrot.lane.b32.xlu0 %v628, 12
        %v669 = vpop.permute.xlu0 %668
        %670 = vrot.lane.b32.xlu0 %v632, 12
        %v671 = vpop.permute.xlu0 %670
        %672 = vrot.lane.b32.xlu0 %v641, 12
        %v673 = vpop.permute.xlu0 %672
        %v675 = vunpack.c.l.b16 %v222
        %v676 = vpack.c.b16 %v277, %v675
        %vm677 = vcmask 1045504
        %v678 = vrot.slane %v676, 2
        %v679 = vrot.slane %v309, 2
        %v680 = vsel %vm677, %v678, %v679
        %v681 = vrot.slane %v310, 2
        %v682 = vsel %vm677, %v679, %v681
        %v683 = vrot.slane %v311, 2
        %v684 = vsel %vm677, %v681, %v683
        %v685 = vrot.slane %v312, 2
        %v686 = vsel %vm677, %v683, %v685
        %v687 = vrot.slane %v313, 2
        %v688 = vsel %vm677, %v685, %v687
        %v689 = vrot.slane %v314, 2
        %v690 = vsel %vm677, %v687, %v689
        %v691 = vrot.slane %v315, 2
        %v692 = vsel %vm677, %v689, %v691
        %v693 = vrot.slane %v316, 2
        %v694 = vsel %vm677, %v691, %v693
        %v695 = vrot.slane %v317, 2
        %v696 = vsel %vm677, %v693, %v695
        %v697 = vrot.slane %v318, 2
        %v698 = vsel %vm677, %v695, %v697
        %v699 = vrot.slane %v319, 2
        %v700 = vsel %vm677, %v697, %v699
        %v701 = vrot.slane %v320, 2
        %v702 = vsel %vm677, %v699, %v701
        %v703 = vrot.slane %v321, 2
        %v704 = vsel %vm677, %v701, %v703
        %v705 = vrot.slane %v322, 2
        %v706 = vsel %vm677, %v703, %v705
        %v707 = vrot.slane %v323, 2
        %v708 = vsel %vm677, %v705, %v707
        %v709 = vrot.slane %v563, 2
        %v710 = vsel %vm677, %v707, %v709
        %711 = vrot.lane.b32.xlu0 %v680, 16
        %v712 = vpop.permute.xlu0 %711
        %713 = vrot.lane.b32.xlu0 %v682, 16
        %v714 = vpop.permute.xlu0 %713
        %715 = vrot.lane.b32.xlu0 %v684, 16
        %v716 = vpop.permute.xlu0 %715
        %717 = vrot.lane.b32.xlu0 %v686, 16
        %v718 = vpop.permute.xlu0 %717
        %719 = vrot.lane.b32.xlu0 %v688, 16
        %v720 = vpop.permute.xlu0 %719
        %721 = vrot.lane.b32.xlu0 %v690, 16
        %v722 = vpop.permute.xlu0 %721
        %723 = vrot.lane.b32.xlu0 %v692, 16
        %v724 = vpop.permute.xlu0 %723
        %725 = vrot.lane.b32.xlu0 %v694, 16
        %v726 = vpop.permute.xlu0 %725
        %727 = vrot.lane.b32.xlu0 %v696, 16
        %v728 = vpop.permute.xlu0 %727
        %729 = vrot.lane.b32.xlu0 %v698, 16
        %v730 = vpop.permute.xlu0 %729
        %731 = vrot.lane.b32.xlu0 %v700, 16
        %v732 = vpop.permute.xlu0 %731
        %733 = vrot.lane.b32.xlu0 %v702, 16
        %v734 = vpop.permute.xlu0 %733
        %735 = vrot.lane.b32.xlu0 %v704, 16
        %v736 = vpop.permute.xlu0 %735
        %737 = vrot.lane.b32.xlu0 %v706, 16
        %v738 = vpop.permute.xlu0 %737
        %739 = vrot.lane.b32.xlu0 %v708, 16
        %v740 = vpop.permute.xlu0 %739
        %741 = vrot.lane.b32.xlu0 %v710, 16
        %v742 = vpop.permute.xlu0 %741
        %v744 = vunpack.c.l.b16 %v223
        %v745 = vpack.c.b16 %v744, %v744
        %vm746 = vsmask.f32 5376
        %v748 = vshrl.u32 %v676, 16
        %v750 = vrot.slane %v748, 2
        %v751 = vshll.u32 %v676, 16
        %v753 = vrot.slane %v751, 3
        %v754 = vor.u32 %v750, %v753
        %v755 = vrot.slane %v340, 2
        %v756 = vrot.slane %v336, 3
        %v757 = vor.u32 %v755, %v756
        %v758 = vsel %vm746, %v754, %v757
        %v759 = vrot.slane %v348, 2
        %v760 = vrot.slane %v344, 3
        %v761 = vor.u32 %v759, %v760
        %v762 = vsel %vm746, %v757, %v761
        %v763 = vrot.slane %v356, 2
        %v764 = vrot.slane %v352, 3
        %v765 = vor.u32 %v763, %v764
        %v766 = vsel %vm746, %v761, %v765
        %v767 = vrot.slane %v364, 2
        %v768 = vrot.slane %v360, 3
        %v769 = vor.u32 %v767, %v768
        %v770 = vsel %vm746, %v765, %v769
        %v771 = vrot.slane %v372, 2
        %v772 = vrot.slane %v368, 3
        %v773 = vor.u32 %v771, %v772
        %v774 = vsel %vm746, %v769, %v773
        %v775 = vrot.slane %v380, 2
        %v776 = vrot.slane %v376, 3
        %v777 = vor.u32 %v775, %v776
        %v778 = vsel %vm746, %v773, %v777
        %v779 = vrot.slane %v388, 2
        %v780 = vrot.slane %v384, 3
        %v781 = vor.u32 %v779, %v780
        %v782 = vsel %vm746, %v777, %v781
        %v783 = vrot.slane %v396, 2
        %v784 = vrot.slane %v392, 3
        %v785 = vor.u32 %v783, %v784
        %v786 = vsel %vm746, %v781, %v785
        %v787 = vrot.slane %v404, 2
        %v788 = vrot.slane %v400, 3
        %v789 = vor.u32 %v787, %v788
        %v790 = vsel %vm746, %v785, %v789
        %v791 = vrot.slane %v412, 2
        %v792 = vrot.slane %v408, 3
        %v793 = vor.u32 %v791, %v792
        %v794 = vsel %vm746, %v789, %v793
        %v795 = vrot.slane %v420, 2
        %v796 = vrot.slane %v416, 3
        %v797 = vor.u32 %v795, %v796
        %v798 = vsel %vm746, %v793, %v797
        %v799 = vrot.slane %v428, 2
        %v800 = vrot.slane %v424, 3
        %v801 = vor.u32 %v799, %v800
        %v802 = vsel %vm746, %v797, %v801
        %v803 = vrot.slane %v436, 2
        %v804 = vrot.slane %v432, 3
        %v805 = vor.u32 %v803, %v804
        %v806 = vsel %vm746, %v801, %v805
        %v807 = vrot.slane %v444, 2
        %v808 = vrot.slane %v440, 3
        %v809 = vor.u32 %v807, %v808
        %v810 = vsel %vm746, %v805, %v809
        %v811 = vrot.slane %v452, 2
        %v812 = vrot.slane %v448, 3
        %v813 = vor.u32 %v811, %v812
        %v814 = vsel %vm746, %v809, %v813
        %v816 = vshrl.u32 %v745, 16
        %v818 = vrot.slane %v816, 2
        %v819 = vshll.u32 %v745, 16
        %v821 = vrot.slane %v819, 3
        %v822 = vor.u32 %v818, %v821
        %v823 = vsel %vm746, %v813, %v822
        %824 = vrot.lane.b32.xlu0 %v758, 20
        %v825 = vpop.permute.xlu0 %824
        %826 = vrot.lane.b32.xlu0 %v762, 20
        %v827 = vpop.permute.xlu0 %826
        %828 = vrot.lane.b32.xlu0 %v766, 20
        %v829 = vpop.permute.xlu0 %828
        %830 = vrot.lane.b32.xlu0 %v770, 20
        %v831 = vpop.permute.xlu0 %830
        %832 = vrot.lane.b32.xlu0 %v774, 20
        %v833 = vpop.permute.xlu0 %832
        %834 = vrot.lane.b32.xlu0 %v778, 20
        %v835 = vpop.permute.xlu0 %834
        %836 = vrot.lane.b32.xlu0 %v782, 20
        %v837 = vpop.permute.xlu0 %836
        %838 = vrot.lane.b32.xlu0 %v786, 20
        %v839 = vpop.permute.xlu0 %838
        %840 = vrot.lane.b32.xlu0 %v790, 20
        %v841 = vpop.permute.xlu0 %840
        %842 = vrot.lane.b32.xlu0 %v794, 20
        %v843 = vpop.permute.xlu0 %842
        %844 = vrot.lane.b32.xlu0 %v798, 20
        %v845 = vpop.permute.xlu0 %844
        %846 = vrot.lane.b32.xlu0 %v802, 20
        %v847 = vpop.permute.xlu0 %846
        %848 = vrot.lane.b32.xlu0 %v806, 20
        %v849 = vpop.permute.xlu0 %848
        %850 = vrot.lane.b32.xlu0 %v810, 20
        %v851 = vpop.permute.xlu0 %850
        %852 = vrot.lane.b32.xlu0 %v814, 20
        %v853 = vpop.permute.xlu0 %852
        %854 = vrot.lane.b32.xlu0 %v823, 20
        %v855 = vpop.permute.xlu0 %854
        %v857 = vunpack.c.l.b16 %v224
        %v858 = vpack.c.b16 %v277, %v857
        %vm859 = vcmask 1044480
        %v860 = vrot.slane %v858, 3
        %v861 = vrot.slane %v309, 3
        %v862 = vsel %vm859, %v860, %v861
        %v863 = vrot.slane %v310, 3
        %v864 = vsel %vm859, %v861, %v863
        %v865 = vrot.slane %v311, 3
        %v866 = vsel %vm859, %v863, %v865
        %v867 = vrot.slane %v312, 3
        %v868 = vsel %vm859, %v865, %v867
        %v869 = vrot.slane %v313, 3
        %v870 = vsel %vm859, %v867, %v869
        %v871 = vrot.slane %v314, 3
        %v872 = vsel %vm859, %v869, %v871
        %v873 = vrot.slane %v315, 3
        %v874 = vsel %vm859, %v871, %v873
        %v875 = vrot.slane %v316, 3
        %v876 = vsel %vm859, %v873, %v875
        %v877 = vrot.slane %v317, 3
        %v878 = vsel %vm859, %v875, %v877
        %v879 = vrot.slane %v318, 3
        %v880 = vsel %vm859, %v877, %v879
        %v881 = vrot.slane %v319, 3
        %v882 = vsel %vm859, %v879, %v881
        %v883 = vrot.slane %v320, 3
        %v884 = vsel %vm859, %v881, %v883
        %v885 = vrot.slane %v321, 3
        %v886 = vsel %vm859, %v883, %v885
        %v887 = vrot.slane %v322, 3
        %v888 = vsel %vm859, %v885, %v887
        %v889 = vrot.slane %v323, 3
        %v890 = vsel %vm859, %v887, %v889
        %v891 = vrot.slane %v745, 3
        %v892 = vsel %vm859, %v889, %v891
        %893 = vrot.lane.b32.xlu0 %v862, 24
        %v894 = vpop.permute.xlu0 %893
        %895 = vrot.lane.b32.xlu0 %v864, 24
        %v896 = vpop.permute.xlu0 %895
        %897 = vrot.lane.b32.xlu0 %v866, 24
        %v898 = vpop.permute.xlu0 %897
        %899 = vrot.lane.b32.xlu0 %v868, 24
        %v900 = vpop.permute.xlu0 %899
        %901 = vrot.lane.b32.xlu0 %v870, 24
        %v902 = vpop.permute.xlu0 %901
        %903 = vrot.lane.b32.xlu0 %v872, 24
        %v904 = vpop.permute.xlu0 %903
        %905 = vrot.lane.b32.xlu0 %v874, 24
        %v906 = vpop.permute.xlu0 %905
        %907 = vrot.lane.b32.xlu0 %v876, 24
        %v908 = vpop.permute.xlu0 %907
        %909 = vrot.lane.b32.xlu0 %v878, 24
        %v910 = vpop.permute.xlu0 %909
        %911 = vrot.lane.b32.xlu0 %v880, 24
        %v912 = vpop.permute.xlu0 %911
        %913 = vrot.lane.b32.xlu0 %v882, 24
        %v914 = vpop.permute.xlu0 %913
        %915 = vrot.lane.b32.xlu0 %v884, 24
        %v916 = vpop.permute.xlu0 %915
        %917 = vrot.lane.b32.xlu0 %v886, 24
        %v918 = vpop.permute.xlu0 %917
        %919 = vrot.lane.b32.xlu0 %v888, 24
        %v920 = vpop.permute.xlu0 %919
        %921 = vrot.lane.b32.xlu0 %v890, 24
        %v922 = vpop.permute.xlu0 %921
        %923 = vrot.lane.b32.xlu0 %v892, 24
        %v924 = vpop.permute.xlu0 %923
        %v926 = vunpack.c.l.b16 %v225
        %v927 = vpack.c.b16 %v926, %v926
        %vm928 = vsmask.f32 4352
        %v930 = vshrl.u32 %v858, 16
        %v932 = vrot.slane %v930, 3
        %v933 = vshll.u32 %v858, 16
        %v935 = vrot.slane %v933, 4
        %v936 = vor.u32 %v932, %v935
        %v937 = vrot.slane %v340, 3
        %v938 = vrot.slane %v336, 4
        %v939 = vor.u32 %v937, %v938
        %v940 = vsel %vm928, %v936, %v939
        %v941 = vrot.slane %v348, 3
        %v942 = vrot.slane %v344, 4
        %v943 = vor.u32 %v941, %v942
        %v944 = vsel %vm928, %v939, %v943
        %v945 = vrot.slane %v356, 3
        %v946 = vrot.slane %v352, 4
        %v947 = vor.u32 %v945, %v946
        %v948 = vsel %vm928, %v943, %v947
        %v949 = vrot.slane %v364, 3
        %v950 = vrot.slane %v360, 4
        %v951 = vor.u32 %v949, %v950
        %v952 = vsel %vm928, %v947, %v951
        %v953 = vrot.slane %v372, 3
        %v954 = vrot.slane %v368, 4
        %v955 = vor.u32 %v953, %v954
        %v956 = vsel %vm928, %v951, %v955
        %v957 = vrot.slane %v380, 3
        %v958 = vrot.slane %v376, 4
        %v959 = vor.u32 %v957, %v958
        %v960 = vsel %vm928, %v955, %v959
        %v961 = vrot.slane %v388, 3
        %v962 = vrot.slane %v384, 4
        %v963 = vor.u32 %v961, %v962
        %v964 = vsel %vm928, %v959, %v963
        %v965 = vrot.slane %v396, 3
        %v966 = vrot.slane %v392, 4
        %v967 = vor.u32 %v965, %v966
        %v968 = vsel %vm928, %v963, %v967
        %v969 = vrot.slane %v404, 3
        %v970 = vrot.slane %v400, 4
        %v971 = vor.u32 %v969, %v970
        %v972 = vsel %vm928, %v967, %v971
        %v973 = vrot.slane %v412, 3
        %v974 = vrot.slane %v408, 4
        %v975 = vor.u32 %v973, %v974
        %v976 = vsel %vm928, %v971, %v975
        %v977 = vrot.slane %v420, 3
        %v978 = vrot.slane %v416, 4
        %v979 = vor.u32 %v977, %v978
        %v980 = vsel %vm928, %v975, %v979
        %v981 = vrot.slane %v428, 3
        %v982 = vrot.slane %v424, 4
        %v983 = vor.u32 %v981, %v982
        %v984 = vsel %vm928, %v979, %v983
        %v985 = vrot.slane %v436, 3
        %v986 = vrot.slane %v432, 4
        %v987 = vor.u32 %v985, %v986
        %v988 = vsel %vm928, %v983, %v987
        %v989 = vrot.slane %v444, 3
        %v990 = vrot.slane %v440, 4
        %v991 = vor.u32 %v989, %v990
        %v992 = vsel %vm928, %v987, %v991
        %v993 = vrot.slane %v452, 3
        %v994 = vrot.slane %v448, 4
        %v995 = vor.u32 %v993, %v994
        %v996 = vsel %vm928, %v991, %v995
        %v998 = vshrl.u32 %v927, 16
        %v1000 = vrot.slane %v998, 3
        %v1001 = vshll.u32 %v927, 16
        %v1003 = vrot.slane %v1001, 4
        %v1004 = vor.u32 %v1000, %v1003
        %v1005 = vsel %vm928, %v995, %v1004
        %1006 = vrot.lane.b32.xlu0 %v940, 28
        %v1007 = vpop.permute.xlu0 %1006
        %1008 = vrot.lane.b32.xlu0 %v944, 28
        %v1009 = vpop.permute.xlu0 %1008
        %1010 = vrot.lane.b32.xlu0 %v948, 28
        %v1011 = vpop.permute.xlu0 %1010
        %1012 = vrot.lane.b32.xlu0 %v952, 28
        %v1013 = vpop.permute.xlu0 %1012
        %1014 = vrot.lane.b32.xlu0 %v956, 28
        %v1015 = vpop.permute.xlu0 %1014
        %1016 = vrot.lane.b32.xlu0 %v960, 28
        %v1017 = vpop.permute.xlu0 %1016
        %1018 = vrot.lane.b32.xlu0 %v964, 28
        %v1019 = vpop.permute.xlu0 %1018
        %1020 = vrot.lane.b32.xlu0 %v968, 28
        %v1021 = vpop.permute.xlu0 %1020
        %1022 = vrot.lane.b32.xlu0 %v972, 28
        %v1023 = vpop.permute.xlu0 %1022
        %1024 = vrot.lane.b32.xlu0 %v976, 28
        %v1025 = vpop.permute.xlu0 %1024
        %1026 = vrot.lane.b32.xlu0 %v980, 28
        %v1027 = vpop.permute.xlu0 %1026
        %1028 = vrot.lane.b32.xlu0 %v984, 28
        %v1029 = vpop.permute.xlu0 %1028
        %1030 = vrot.lane.b32.xlu0 %v988, 28
        %v1031 = vpop.permute.xlu0 %1030
        %1032 = vrot.lane.b32.xlu0 %v992, 28
        %v1033 = vpop.permute.xlu0 %1032
        %1034 = vrot.lane.b32.xlu0 %v996, 28
        %v1035 = vpop.permute.xlu0 %1034
        %1036 = vrot.lane.b32.xlu0 %v1005, 28
        %v1037 = vpop.permute.xlu0 %1036
        %v1038 = vpack.c.b16 %v278, %v277
        %v1039 = vpack.c.b16 %v280, %v279
        %v1040 = vpack.c.b16 %v282, %v281
        %v1041 = vpack.c.b16 %v284, %v283
        %v1042 = vpack.c.b16 %v286, %v285
        %v1043 = vpack.c.b16 %v288, %v287
        %v1044 = vpack.c.b16 %v290, %v289
        %v1045 = vpack.c.b16 %v292, %v291
        %v1046 = vpack.c.b16 %v294, %v293
        %v1047 = vpack.c.b16 %v296, %v295
        %v1048 = vpack.c.b16 %v298, %v297
        %v1049 = vpack.c.b16 %v300, %v299
        %v1050 = vpack.c.b16 %v302, %v301
        %v1051 = vpack.c.b16 %v304, %v303
        %v1052 = vpack.c.b16 %v306, %v305
        %v1053 = vpack.c.b16 %v926, %v307
        %1054 = vrot.lane.b32.xlu0 %v1038, 32
        %v1055 = vpop.permute.xlu0 %1054
        %1056 = vrot.lane.b32.xlu0 %v1039, 32
        %v1057 = vpop.permute.xlu0 %1056
        %1058 = vrot.lane.b32.xlu0 %v1040, 32
        %v1059 = vpop.permute.xlu0 %1058
        %1060 = vrot.lane.b32.xlu0 %v1041, 32
        %v1061 = vpop.permute.xlu0 %1060
        %1062 = vrot.lane.b32.xlu0 %v1042, 32
        %v1063 = vpop.permute.xlu0 %1062
        %1064 = vrot.lane.b32.xlu0 %v1043, 32
        %v1065 = vpop.permute.xlu0 %1064
        %1066 = vrot.lane.b32.xlu0 %v1044, 32
        %v1067 = vpop.permute.xlu0 %1066
        %1068 = vrot.lane.b32.xlu0 %v1045, 32
        %v1069 = vpop.permute.xlu0 %1068
        %1070 = vrot.lane.b32.xlu0 %v1046, 32
        %v1071 = vpop.permute.xlu0 %1070
        %1072 = vrot.lane.b32.xlu0 %v1047, 32
        %v1073 = vpop.permute.xlu0 %1072
        %1074 = vrot.lane.b32.xlu0 %v1048, 32
        %v1075 = vpop.permute.xlu0 %1074
        %1076 = vrot.lane.b32.xlu0 %v1049, 32
        %v1077 = vpop.permute.xlu0 %1076
        %1078 = vrot.lane.b32.xlu0 %v1050, 32
        %v1079 = vpop.permute.xlu0 %1078
        %1080 = vrot.lane.b32.xlu0 %v1051, 32
        %v1081 = vpop.permute.xlu0 %1080
        %1082 = vrot.lane.b32.xlu0 %v1052, 32
        %v1083 = vpop.permute.xlu0 %1082
        %1084 = vrot.lane.b32.xlu0 %v1053, 32
        %v1085 = vpop.permute.xlu0 %1084
        %v1087 = vunpack.c.l.b16 %v226
        %v1088 = vpack.c.b16 %v1087, %v1087
        %v1090 = vshrl.u32 %v1038, 16
        %v1092 = vshll.u32 %v1038, 16
        %v1094 = vrot.slane %v1092, 1
        %v1095 = vor.u32 %v1090, %v1094
        %v1097 = vshll.u32 %v1039, 16
        %v1099 = vrot.slane %v1097, 1
        %v1100 = vsel %vm327, %v1095, %v1099
        %v1101 = vshrl.u32 %v1039, 16
        %v1103 = vor.u32 %v1101, %v1099
        %v1105 = vshll.u32 %v1040, 16
        %v1107 = vrot.slane %v1105, 1
        %v1108 = vsel %vm327, %v1103, %v1107
        %v1109 = vshrl.u32 %v1040, 16
        %v1111 = vor.u32 %v1109, %v1107
        %v1113 = vshll.u32 %v1041, 16
        %v1115 = vrot.slane %v1113, 1
        %v1116 = vsel %vm327, %v1111, %v1115
        %v1117 = vshrl.u32 %v1041, 16
        %v1119 = vor.u32 %v1117, %v1115
        %v1121 = vshll.u32 %v1042, 16
        %v1123 = vrot.slane %v1121, 1
        %v1124 = vsel %vm327, %v1119, %v1123
        %v1125 = vshrl.u32 %v1042, 16
        %v1127 = vor.u32 %v1125, %v1123
        %v1129 = vshll.u32 %v1043, 16
        %v1131 = vrot.slane %v1129, 1
        %v1132 = vsel %vm327, %v1127, %v1131
        %v1133 = vshrl.u32 %v1043, 16
        %v1135 = vor.u32 %v1133, %v1131
        %v1137 = vshll.u32 %v1044, 16
        %v1139 = vrot.slane %v1137, 1
        %v1140 = vsel %vm327, %v1135, %v1139
        %v1141 = vshrl.u32 %v1044, 16
        %v1143 = vor.u32 %v1141, %v1139
        %v1145 = vshll.u32 %v1045, 16
        %v1147 = vrot.slane %v1145, 1
        %v1148 = vsel %vm327, %v1143, %v1147
        %v1149 = vshrl.u32 %v1045, 16
        %v1151 = vor.u32 %v1149, %v1147
        %v1153 = vshll.u32 %v1046, 16
        %v1155 = vrot.slane %v1153, 1
        %v1156 = vsel %vm327, %v1151, %v1155
        %v1157 = vshrl.u32 %v1046, 16
        %v1159 = vor.u32 %v1157, %v1155
        %v1161 = vshll.u32 %v1047, 16
        %v1163 = vrot.slane %v1161, 1
        %v1164 = vsel %vm327, %v1159, %v1163
        %v1165 = vshrl.u32 %v1047, 16
        %v1167 = vor.u32 %v1165, %v1163
        %v1169 = vshll.u32 %v1048, 16
        %v1171 = vrot.slane %v1169, 1
        %v1172 = vsel %vm327, %v1167, %v1171
        %v1173 = vshrl.u32 %v1048, 16
        %v1175 = vor.u32 %v1173, %v1171
        %v1177 = vshll.u32 %v1049, 16
        %v1179 = vrot.slane %v1177, 1
        %v1180 = vsel %vm327, %v1175, %v1179
        %v1181 = vshrl.u32 %v1049, 16
        %v1183 = vor.u32 %v1181, %v1179
        %v1185 = vshll.u32 %v1050, 16
        %v1187 = vrot.slane %v1185, 1
        %v1188 = vsel %vm327, %v1183, %v1187
        %v1189 = vshrl.u32 %v1050, 16
        %v1191 = vor.u32 %v1189, %v1187
        %v1193 = vshll.u32 %v1051, 16
        %v1195 = vrot.slane %v1193, 1
        %v1196 = vsel %vm327, %v1191, %v1195
        %v1197 = vshrl.u32 %v1051, 16
        %v1199 = vor.u32 %v1197, %v1195
        %v1201 = vshll.u32 %v1052, 16
        %v1203 = vrot.slane %v1201, 1
        %v1204 = vsel %vm327, %v1199, %v1203
        %v1205 = vshrl.u32 %v1052, 16
        %v1207 = vor.u32 %v1205, %v1203
        %v1209 = vshll.u32 %v1053, 16
        %v1211 = vrot.slane %v1209, 1
        %v1212 = vsel %vm327, %v1207, %v1211
        %v1213 = vshrl.u32 %v1053, 16
        %v1215 = vor.u32 %v1213, %v1211
        %v1217 = vshll.u32 %v1088, 16
        %v1219 = vrot.slane %v1217, 1
        %v1220 = vsel %vm327, %v1215, %v1219
        %1221 = vrot.lane.b32.xlu0 %v1100, 36
        %v1222 = vpop.permute.xlu0 %1221
        %1223 = vrot.lane.b32.xlu0 %v1108, 36
        %v1224 = vpop.permute.xlu0 %1223
        %1225 = vrot.lane.b32.xlu0 %v1116, 36
        %v1226 = vpop.permute.xlu0 %1225
        %1227 = vrot.lane.b32.xlu0 %v1124, 36
        %v1228 = vpop.permute.xlu0 %1227
        %1229 = vrot.lane.b32.xlu0 %v1132, 36
        %v1230 = vpop.permute.xlu0 %1229
        %1231 = vrot.lane.b32.xlu0 %v1140, 36
        %v1232 = vpop.permute.xlu0 %1231
        %1233 = vrot.lane.b32.xlu0 %v1148, 36
        %v1234 = vpop.permute.xlu0 %1233
        %1235 = vrot.lane.b32.xlu0 %v1156, 36
        %v1236 = vpop.permute.xlu0 %1235
        %1237 = vrot.lane.b32.xlu0 %v1164, 36
        %v1238 = vpop.permute.xlu0 %1237
        %1239 = vrot.lane.b32.xlu0 %v1172, 36
        %v1240 = vpop.permute.xlu0 %1239
        %1241 = vrot.lane.b32.xlu0 %v1180, 36
        %v1242 = vpop.permute.xlu0 %1241
        %1243 = vrot.lane.b32.xlu0 %v1188, 36
        %v1244 = vpop.permute.xlu0 %1243
        %1245 = vrot.lane.b32.xlu0 %v1196, 36
        %v1246 = vpop.permute.xlu0 %1245
        %1247 = vrot.lane.b32.xlu0 %v1204, 36
        %v1248 = vpop.permute.xlu0 %1247
        %1249 = vrot.lane.b32.xlu0 %v1212, 36
        %v1250 = vpop.permute.xlu0 %1249
        %1251 = vrot.lane.b32.xlu0 %v1220, 36
        %v1252 = vpop.permute.xlu0 %1251
        %v1254 = vunpack.c.l.b16 %v227
        %v1255 = vpack.c.b16 %v278, %v1254
        %v1256 = vrot.slane %v1255, 1
        %v1257 = vrot.slane %v1039, 1
        %v1258 = vsel %vm495, %v1256, %v1257
        %v1259 = vrot.slane %v1040, 1
        %v1260 = vsel %vm495, %v1257, %v1259
        %v1261 = vrot.slane %v1041, 1
        %v1262 = vsel %vm495, %v1259, %v1261
        %v1263 = vrot.slane %v1042, 1
        %v1264 = vsel %vm495, %v1261, %v1263
        %v1265 = vrot.slane %v1043, 1
        %v1266 = vsel %vm495, %v1263, %v1265
        %v1267 = vrot.slane %v1044, 1
        %v1268 = vsel %vm495, %v1265, %v1267
        %v1269 = vrot.slane %v1045, 1
        %v1270 = vsel %vm495, %v1267, %v1269
        %v1271 = vrot.slane %v1046, 1
        %v1272 = vsel %vm495, %v1269, %v1271
        %v1273 = vrot.slane %v1047, 1
        %v1274 = vsel %vm495, %v1271, %v1273
        %v1275 = vrot.slane %v1048, 1
        %v1276 = vsel %vm495, %v1273, %v1275
        %v1277 = vrot.slane %v1049, 1
        %v1278 = vsel %vm495, %v1275, %v1277
        %v1279 = vrot.slane %v1050, 1
        %v1280 = vsel %vm495, %v1277, %v1279
        %v1281 = vrot.slane %v1051, 1
        %v1282 = vsel %vm495, %v1279, %v1281
        %v1283 = vrot.slane %v1052, 1
        %v1284 = vsel %vm495, %v1281, %v1283
        %v1285 = vrot.slane %v1053, 1
        %v1286 = vsel %vm495, %v1283, %v1285
        %v1287 = vrot.slane %v1088, 1
        %v1288 = vsel %vm495, %v1285, %v1287
        %1289 = vrot.lane.b32.xlu0 %v1258, 40
        %v1290 = vpop.permute.xlu0 %1289
        %1291 = vrot.lane.b32.xlu0 %v1260, 40
        %v1292 = vpop.permute.xlu0 %1291
        %1293 = vrot.lane.b32.xlu0 %v1262, 40
        %v1294 = vpop.permute.xlu0 %1293
        %1295 = vrot.lane.b32.xlu0 %v1264, 40
        %v1296 = vpop.permute.xlu0 %1295
        %1297 = vrot.lane.b32.xlu0 %v1266, 40
        %v1298 = vpop.permute.xlu0 %1297
        %1299 = vrot.lane.b32.xlu0 %v1268, 40
        %v1300 = vpop.permute.xlu0 %1299
        %1301 = vrot.lane.b32.xlu0 %v1270, 40
        %v1302 = vpop.permute.xlu0 %1301
        %1303 = vrot.lane.b32.xlu0 %v1272, 40
        %v1304 = vpop.permute.xlu0 %1303
        %1305 = vrot.lane.b32.xlu0 %v1274, 40
        %v1306 = vpop.permute.xlu0 %1305
        %1307 = vrot.lane.b32.xlu0 %v1276, 40
        %v1308 = vpop.permute.xlu0 %1307
        %1309 = vrot.lane.b32.xlu0 %v1278, 40
        %v1310 = vpop.permute.xlu0 %1309
        %1311 = vrot.lane.b32.xlu0 %v1280, 40
        %v1312 = vpop.permute.xlu0 %1311
        %1313 = vrot.lane.b32.xlu0 %v1282, 40
        %v1314 = vpop.permute.xlu0 %1313
        %1315 = vrot.lane.b32.xlu0 %v1284, 40
        %v1316 = vpop.permute.xlu0 %1315
        %1317 = vrot.lane.b32.xlu0 %v1286, 40
        %v1318 = vpop.permute.xlu0 %1317
        %1319 = vrot.lane.b32.xlu0 %v1288, 40
        %v1320 = vpop.permute.xlu0 %1319
        %v1322 = vunpack.c.l.b16 %v228
        %v1323 = vpack.c.b16 %v1322, %v1322
        %v1325 = vshrl.u32 %v1255, 16
        %v1327 = vrot.slane %v1325, 1
        %v1328 = vshll.u32 %v1255, 16
        %v1330 = vrot.slane %v1328, 2
        %v1331 = vor.u32 %v1327, %v1330
        %v1332 = vrot.slane %v1101, 1
        %v1333 = vrot.slane %v1097, 2
        %v1334 = vor.u32 %v1332, %v1333
        %v1335 = vsel %vm564, %v1331, %v1334
        %v1336 = vrot.slane %v1109, 1
        %v1337 = vrot.slane %v1105, 2
        %v1338 = vor.u32 %v1336, %v1337
        %v1339 = vsel %vm564, %v1334, %v1338
        %v1340 = vrot.slane %v1117, 1
        %v1341 = vrot.slane %v1113, 2
        %v1342 = vor.u32 %v1340, %v1341
        %v1343 = vsel %vm564, %v1338, %v1342
        %v1344 = vrot.slane %v1125, 1
        %v1345 = vrot.slane %v1121, 2
        %v1346 = vor.u32 %v1344, %v1345
        %v1347 = vsel %vm564, %v1342, %v1346
        %v1348 = vrot.slane %v1133, 1
        %v1349 = vrot.slane %v1129, 2
        %v1350 = vor.u32 %v1348, %v1349
        %v1351 = vsel %vm564, %v1346, %v1350
        %v1352 = vrot.slane %v1141, 1
        %v1353 = vrot.slane %v1137, 2
        %v1354 = vor.u32 %v1352, %v1353
        %v1355 = vsel %vm564, %v1350, %v1354
        %v1356 = vrot.slane %v1149, 1
        %v1357 = vrot.slane %v1145, 2
        %v1358 = vor.u32 %v1356, %v1357
        %v1359 = vsel %vm564, %v1354, %v1358
        %v1360 = vrot.slane %v1157, 1
        %v1361 = vrot.slane %v1153, 2
        %v1362 = vor.u32 %v1360, %v1361
        %v1363 = vsel %vm564, %v1358, %v1362
        %v1364 = vrot.slane %v1165, 1
        %v1365 = vrot.slane %v1161, 2
        %v1366 = vor.u32 %v1364, %v1365
        %v1367 = vsel %vm564, %v1362, %v1366
        %v1368 = vrot.slane %v1173, 1
        %v1369 = vrot.slane %v1169, 2
        %v1370 = vor.u32 %v1368, %v1369
        %v1371 = vsel %vm564, %v1366, %v1370
        %v1372 = vrot.slane %v1181, 1
        %v1373 = vrot.slane %v1177, 2
        %v1374 = vor.u32 %v1372, %v1373
        %v1375 = vsel %vm564, %v1370, %v1374
        %v1376 = vrot.slane %v1189, 1
        %v1377 = vrot.slane %v1185, 2
        %v1378 = vor.u32 %v1376, %v1377
        %v1379 = vsel %vm564, %v1374, %v1378
        %v1380 = vrot.slane %v1197, 1
        %v1381 = vrot.slane %v1193, 2
        %v1382 = vor.u32 %v1380, %v1381
        %v1383 = vsel %vm564, %v1378, %v1382
        %v1384 = vrot.slane %v1205, 1
        %v1385 = vrot.slane %v1201, 2
        %v1386 = vor.u32 %v1384, %v1385
        %v1387 = vsel %vm564, %v1382, %v1386
        %v1388 = vrot.slane %v1213, 1
        %v1389 = vrot.slane %v1209, 2
        %v1390 = vor.u32 %v1388, %v1389
        %v1391 = vsel %vm564, %v1386, %v1390
        %v1393 = vshrl.u32 %v1323, 16
        %v1395 = vrot.slane %v1393, 1
        %v1396 = vshll.u32 %v1323, 16
        %v1398 = vrot.slane %v1396, 2
        %v1399 = vor.u32 %v1395, %v1398
        %v1400 = vsel %vm564, %v1390, %v1399
        %1401 = vrot.lane.b32.xlu0 %v1335, 44
        %v1402 = vpop.permute.xlu0 %1401
        %1403 = vrot.lane.b32.xlu0 %v1339, 44
        %v1404 = vpop.permute.xlu0 %1403
        %1405 = vrot.lane.b32.xlu0 %v1343, 44
        %v1406 = vpop.permute.xlu0 %1405
        %1407 = vrot.lane.b32.xlu0 %v1347, 44
        %v1408 = vpop.permute.xlu0 %1407
        %1409 = vrot.lane.b32.xlu0 %v1351, 44
        %v1410 = vpop.permute.xlu0 %1409
        %1411 = vrot.lane.b32.xlu0 %v1355, 44
        %v1412 = vpop.permute.xlu0 %1411
        %1413 = vrot.lane.b32.xlu0 %v1359, 44
        %v1414 = vpop.permute.xlu0 %1413
        %1415 = vrot.lane.b32.xlu0 %v1363, 44
        %v1416 = vpop.permute.xlu0 %1415
        %1417 = vrot.lane.b32.xlu0 %v1367, 44
        %v1418 = vpop.permute.xlu0 %1417
        %1419 = vrot.lane.b32.xlu0 %v1371, 44
        %v1420 = vpop.permute.xlu0 %1419
        %1421 = vrot.lane.b32.xlu0 %v1375, 44
        %v1422 = vpop.permute.xlu0 %1421
        %1423 = vrot.lane.b32.xlu0 %v1379, 44
        %v1424 = vpop.permute.xlu0 %1423
        %1425 = vrot.lane.b32.xlu0 %v1383, 44
        %v1426 = vpop.permute.xlu0 %1425
        %1427 = vrot.lane.b32.xlu0 %v1387, 44
        %v1428 = vpop.permute.xlu0 %1427
        %1429 = vrot.lane.b32.xlu0 %v1391, 44
        %v1430 = vpop.permute.xlu0 %1429
        %1431 = vrot.lane.b32.xlu0 %v1400, 44
        %v1432 = vpop.permute.xlu0 %1431
        %v1434 = vunpack.c.l.b16 %v229
        %v1435 = vpack.c.b16 %v278, %v1434
        %v1436 = vrot.slane %v1435, 2
        %v1437 = vrot.slane %v1039, 2
        %v1438 = vsel %vm677, %v1436, %v1437
        %v1439 = vrot.slane %v1040, 2
        %v1440 = vsel %vm677, %v1437, %v1439
        %v1441 = vrot.slane %v1041, 2
        %v1442 = vsel %vm677, %v1439, %v1441
        %v1443 = vrot.slane %v1042, 2
        %v1444 = vsel %vm677, %v1441, %v1443
        %v1445 = vrot.slane %v1043, 2
        %v1446 = vsel %vm677, %v1443, %v1445
        %v1447 = vrot.slane %v1044, 2
        %v1448 = vsel %vm677, %v1445, %v1447
        %v1449 = vrot.slane %v1045, 2
        %v1450 = vsel %vm677, %v1447, %v1449
        %v1451 = vrot.slane %v1046, 2
        %v1452 = vsel %vm677, %v1449, %v1451
        %v1453 = vrot.slane %v1047, 2
        %v1454 = vsel %vm677, %v1451, %v1453
        %v1455 = vrot.slane %v1048, 2
        %v1456 = vsel %vm677, %v1453, %v1455
        %v1457 = vrot.slane %v1049, 2
        %v1458 = vsel %vm677, %v1455, %v1457
        %v1459 = vrot.slane %v1050, 2
        %v1460 = vsel %vm677, %v1457, %v1459
        %v1461 = vrot.slane %v1051, 2
        %v1462 = vsel %vm677, %v1459, %v1461
        %v1463 = vrot.slane %v1052, 2
        %v1464 = vsel %vm677, %v1461, %v1463
        %v1465 = vrot.slane %v1053, 2
        %v1466 = vsel %vm677, %v1463, %v1465
        %v1467 = vrot.slane %v1323, 2
        %v1468 = vsel %vm677, %v1465, %v1467
        %1469 = vrot.lane.b32.xlu0 %v1438, 48
        %v1470 = vpop.permute.xlu0 %1469
        %1471 = vrot.lane.b32.xlu0 %v1440, 48
        %v1472 = vpop.permute.xlu0 %1471
        %1473 = vrot.lane.b32.xlu0 %v1442, 48
        %v1474 = vpop.permute.xlu0 %1473
        %1475 = vrot.lane.b32.xlu0 %v1444, 48
        %v1476 = vpop.permute.xlu0 %1475
        %1477 = vrot.lane.b32.xlu0 %v1446, 48
        %v1478 = vpop.permute.xlu0 %1477
        %1479 = vrot.lane.b32.xlu0 %v1448, 48
        %v1480 = vpop.permute.xlu0 %1479
        %1481 = vrot.lane.b32.xlu0 %v1450, 48
        %v1482 = vpop.permute.xlu0 %1481
        %1483 = vrot.lane.b32.xlu0 %v1452, 48
        %v1484 = vpop.permute.xlu0 %1483
        %1485 = vrot.lane.b32.xlu0 %v1454, 48
        %v1486 = vpop.permute.xlu0 %1485
        %1487 = vrot.lane.b32.xlu0 %v1456, 48
        %v1488 = vpop.permute.xlu0 %1487
        %1489 = vrot.lane.b32.xlu0 %v1458, 48
        %v1490 = vpop.permute.xlu0 %1489
        %1491 = vrot.lane.b32.xlu0 %v1460, 48
        %v1492 = vpop.permute.xlu0 %1491
        %1493 = vrot.lane.b32.xlu0 %v1462, 48
        %v1494 = vpop.permute.xlu0 %1493
        %1495 = vrot.lane.b32.xlu0 %v1464, 48
        %v1496 = vpop.permute.xlu0 %1495
        %1497 = vrot.lane.b32.xlu0 %v1466, 48
        %v1498 = vpop.permute.xlu0 %1497
        %1499 = vrot.lane.b32.xlu0 %v1468, 48
        %v1500 = vpop.permute.xlu0 %1499
        %v1502 = vunpack.c.l.b16 %v230
        %v1503 = vpack.c.b16 %v1502, %v1502
        %v1505 = vshrl.u32 %v1435, 16
        %v1507 = vrot.slane %v1505, 2
        %v1508 = vshll.u32 %v1435, 16
        %v1510 = vrot.slane %v1508, 3
        %v1511 = vor.u32 %v1507, %v1510
        %v1512 = vrot.slane %v1101, 2
        %v1513 = vrot.slane %v1097, 3
        %v1514 = vor.u32 %v1512, %v1513
        %v1515 = vsel %vm746, %v1511, %v1514
        %v1516 = vrot.slane %v1109, 2
        %v1517 = vrot.slane %v1105, 3
        %v1518 = vor.u32 %v1516, %v1517
        %v1519 = vsel %vm746, %v1514, %v1518
        %v1520 = vrot.slane %v1117, 2
        %v1521 = vrot.slane %v1113, 3
        %v1522 = vor.u32 %v1520, %v1521
        %v1523 = vsel %vm746, %v1518, %v1522
        %v1524 = vrot.slane %v1125, 2
        %v1525 = vrot.slane %v1121, 3
        %v1526 = vor.u32 %v1524, %v1525
        %v1527 = vsel %vm746, %v1522, %v1526
        %v1528 = vrot.slane %v1133, 2
        %v1529 = vrot.slane %v1129, 3
        %v1530 = vor.u32 %v1528, %v1529
        %v1531 = vsel %vm746, %v1526, %v1530
        %v1532 = vrot.slane %v1141, 2
        %v1533 = vrot.slane %v1137, 3
        %v1534 = vor.u32 %v1532, %v1533
        %v1535 = vsel %vm746, %v1530, %v1534
        %v1536 = vrot.slane %v1149, 2
        %v1537 = vrot.slane %v1145, 3
        %v1538 = vor.u32 %v1536, %v1537
        %v1539 = vsel %vm746, %v1534, %v1538
        %v1540 = vrot.slane %v1157, 2
        %v1541 = vrot.slane %v1153, 3
        %v1542 = vor.u32 %v1540, %v1541
        %v1543 = vsel %vm746, %v1538, %v1542
        %v1544 = vrot.slane %v1165, 2
        %v1545 = vrot.slane %v1161, 3
        %v1546 = vor.u32 %v1544, %v1545
        %v1547 = vsel %vm746, %v1542, %v1546
        %v1548 = vrot.slane %v1173, 2
        %v1549 = vrot.slane %v1169, 3
        %v1550 = vor.u32 %v1548, %v1549
        %v1551 = vsel %vm746, %v1546, %v1550
        %v1552 = vrot.slane %v1181, 2
        %v1553 = vrot.slane %v1177, 3
        %v1554 = vor.u32 %v1552, %v1553
        %v1555 = vsel %vm746, %v1550, %v1554
        %v1556 = vrot.slane %v1189, 2
        %v1557 = vrot.slane %v1185, 3
        %v1558 = vor.u32 %v1556, %v1557
        %v1559 = vsel %vm746, %v1554, %v1558
        %v1560 = vrot.slane %v1197, 2
        %v1561 = vrot.slane %v1193, 3
        %v1562 = vor.u32 %v1560, %v1561
        %v1563 = vsel %vm746, %v1558, %v1562
        %v1564 = vrot.slane %v1205, 2
        %v1565 = vrot.slane %v1201, 3
        %v1566 = vor.u32 %v1564, %v1565
        %v1567 = vsel %vm746, %v1562, %v1566
        %v1568 = vrot.slane %v1213, 2
        %v1569 = vrot.slane %v1209, 3
        %v1570 = vor.u32 %v1568, %v1569
        %v1571 = vsel %vm746, %v1566, %v1570
        %v1573 = vshrl.u32 %v1503, 16
        %v1575 = vrot.slane %v1573, 2
        %v1576 = vshll.u32 %v1503, 16
        %v1578 = vrot.slane %v1576, 3
        %v1579 = vor.u32 %v1575, %v1578
        %v1580 = vsel %vm746, %v1570, %v1579
        %1581 = vrot.lane.b32.xlu0 %v1515, 52
        %v1582 = vpop.permute.xlu0 %1581
        %1583 = vrot.lane.b32.xlu0 %v1519, 52
        %v1584 = vpop.permute.xlu0 %1583
        %1585 = vrot.lane.b32.xlu0 %v1523, 52
        %v1586 = vpop.permute.xlu0 %1585
        %1587 = vrot.lane.b32.xlu0 %v1527, 52
        %v1588 = vpop.permute.xlu0 %1587
        %1589 = vrot.lane.b32.xlu0 %v1531, 52
        %v1590 = vpop.permute.xlu0 %1589
        %1591 = vrot.lane.b32.xlu0 %v1535, 52
        %v1592 = vpop.permute.xlu0 %1591
        %1593 = vrot.lane.b32.xlu0 %v1539, 52
        %v1594 = vpop.permute.xlu0 %1593
        %1595 = vrot.lane.b32.xlu0 %v1543, 52
        %v1596 = vpop.permute.xlu0 %1595
        %1597 = vrot.lane.b32.xlu0 %v1547, 52
        %v1598 = vpop.permute.xlu0 %1597
        %1599 = vrot.lane.b32.xlu0 %v1551, 52
        %v1600 = vpop.permute.xlu0 %1599
        %1601 = vrot.lane.b32.xlu0 %v1555, 52
        %v1602 = vpop.permute.xlu0 %1601
        %1603 = vrot.lane.b32.xlu0 %v1559, 52
        %v1604 = vpop.permute.xlu0 %1603
        %1605 = vrot.lane.b32.xlu0 %v1563, 52
        %v1606 = vpop.permute.xlu0 %1605
        %1607 = vrot.lane.b32.xlu0 %v1567, 52
        %v1608 = vpop.permute.xlu0 %1607
        %1609 = vrot.lane.b32.xlu0 %v1571, 52
        %v1610 = vpop.permute.xlu0 %1609
        %1611 = vrot.lane.b32.xlu0 %v1580, 52
        %v1612 = vpop.permute.xlu0 %1611
        %v1614 = vunpack.c.l.b16 %v231
        %v1615 = vpack.c.b16 %v278, %v1614
        %v1616 = vrot.slane %v1615, 3
        %v1617 = vrot.slane %v1039, 3
        %v1618 = vsel %vm859, %v1616, %v1617
        %v1619 = vrot.slane %v1040, 3
        %v1620 = vsel %vm859, %v1617, %v1619
        %v1621 = vrot.slane %v1041, 3
        %v1622 = vsel %vm859, %v1619, %v1621
        %v1623 = vrot.slane %v1042, 3
        %v1624 = vsel %vm859, %v1621, %v1623
        %v1625 = vrot.slane %v1043, 3
        %v1626 = vsel %vm859, %v1623, %v1625
        %v1627 = vrot.slane %v1044, 3
        %v1628 = vsel %vm859, %v1625, %v1627
        %v1629 = vrot.slane %v1045, 3
        %v1630 = vsel %vm859, %v1627, %v1629
        %v1631 = vrot.slane %v1046, 3
        %v1632 = vsel %vm859, %v1629, %v1631
        %v1633 = vrot.slane %v1047, 3
        %v1634 = vsel %vm859, %v1631, %v1633
        %v1635 = vrot.slane %v1048, 3
        %v1636 = vsel %vm859, %v1633, %v1635
        %v1637 = vrot.slane %v1049, 3
        %v1638 = vsel %vm859, %v1635, %v1637
        %v1639 = vrot.slane %v1050, 3
        %v1640 = vsel %vm859, %v1637, %v1639
        %v1641 = vrot.slane %v1051, 3
        %v1642 = vsel %vm859, %v1639, %v1641
        %v1643 = vrot.slane %v1052, 3
        %v1644 = vsel %vm859, %v1641, %v1643
        %v1645 = vrot.slane %v1053, 3
        %v1646 = vsel %vm859, %v1643, %v1645
        %v1647 = vrot.slane %v1503, 3
        %v1648 = vsel %vm859, %v1645, %v1647
        %1649 = vrot.lane.b32.xlu0 %v1618, 56
        %v1650 = vpop.permute.xlu0 %1649
        %1651 = vrot.lane.b32.xlu0 %v1620, 56
        %v1652 = vpop.permute.xlu0 %1651
        %1653 = vrot.lane.b32.xlu0 %v1622, 56
        %v1654 = vpop.permute.xlu0 %1653
        %1655 = vrot.lane.b32.xlu0 %v1624, 56
        %v1656 = vpop.permute.xlu0 %1655
        %1657 = vrot.lane.b32.xlu0 %v1626, 56
        %v1658 = vpop.permute.xlu0 %1657
        %1659 = vrot.lane.b32.xlu0 %v1628, 56
        %v1660 = vpop.permute.xlu0 %1659
        %1661 = vrot.lane.b32.xlu0 %v1630, 56
        %v1662 = vpop.permute.xlu0 %1661
        %1663 = vrot.lane.b32.xlu0 %v1632, 56
        %v1664 = vpop.permute.xlu0 %1663
        %1665 = vrot.lane.b32.xlu0 %v1634, 56
        %v1666 = vpop.permute.xlu0 %1665
        %1667 = vrot.lane.b32.xlu0 %v1636, 56
        %v1668 = vpop.permute.xlu0 %1667
        %1669 = vrot.lane.b32.xlu0 %v1638, 56
        %v1670 = vpop.permute.xlu0 %1669
        %1671 = vrot.lane.b32.xlu0 %v1640, 56
        %v1672 = vpop.permute.xlu0 %1671
        %1673 = vrot.lane.b32.xlu0 %v1642, 56
        %v1674 = vpop.permute.xlu0 %1673
        %1675 = vrot.lane.b32.xlu0 %v1644, 56
        %v1676 = vpop.permute.xlu0 %1675
        %1677 = vrot.lane.b32.xlu0 %v1646, 56
        %v1678 = vpop.permute.xlu0 %1677
        %1679 = vrot.lane.b32.xlu0 %v1648, 56
        %v1680 = vpop.permute.xlu0 %1679
        %v1682 = vunpack.c.l.b16 %v232
        %v1683 = vpack.c.b16 %v1682, %v1682
        %v1685 = vshrl.u32 %v1615, 16
        %v1687 = vrot.slane %v1685, 3
        %v1688 = vshll.u32 %v1615, 16
        %v1690 = vrot.slane %v1688, 4
        %v1691 = vor.u32 %v1687, %v1690
        %v1692 = vrot.slane %v1101, 3
        %v1693 = vrot.slane %v1097, 4
        %v1694 = vor.u32 %v1692, %v1693
        %v1695 = vsel %vm928, %v1691, %v1694
        %v1696 = vrot.slane %v1109, 3
        %v1697 = vrot.slane %v1105, 4
        %v1698 = vor.u32 %v1696, %v1697
        %v1699 = vsel %vm928, %v1694, %v1698
        %v1700 = vrot.slane %v1117, 3
        %v1701 = vrot.slane %v1113, 4
        %v1702 = vor.u32 %v1700, %v1701
        %v1703 = vsel %vm928, %v1698, %v1702
        %v1704 = vrot.slane %v1125, 3
        %v1705 = vrot.slane %v1121, 4
        %v1706 = vor.u32 %v1704, %v1705
        %v1707 = vsel %vm928, %v1702, %v1706
        %v1708 = vrot.slane %v1133, 3
        %v1709 = vrot.slane %v1129, 4
        %v1710 = vor.u32 %v1708, %v1709
        %v1711 = vsel %vm928, %v1706, %v1710
        %v1712 = vrot.slane %v1141, 3
        %v1713 = vrot.slane %v1137, 4
        %v1714 = vor.u32 %v1712, %v1713
        %v1715 = vsel %vm928, %v1710, %v1714
        %v1716 = vrot.slane %v1149, 3
        %v1717 = vrot.slane %v1145, 4
        %v1718 = vor.u32 %v1716, %v1717
        %v1719 = vsel %vm928, %v1714, %v1718
        %v1720 = vrot.slane %v1157, 3
        %v1721 = vrot.slane %v1153, 4
        %v1722 = vor.u32 %v1720, %v1721
        %v1723 = vsel %vm928, %v1718, %v1722
        %v1724 = vrot.slane %v1165, 3
        %v1725 = vrot.slane %v1161, 4
        %v1726 = vor.u32 %v1724, %v1725
        %v1727 = vsel %vm928, %v1722, %v1726
        %v1728 = vrot.slane %v1173, 3
        %v1729 = vrot.slane %v1169, 4
        %v1730 = vor.u32 %v1728, %v1729
        %v1731 = vsel %vm928, %v1726, %v1730
        %v1732 = vrot.slane %v1181, 3
        %v1733 = vrot.slane %v1177, 4
        %v1734 = vor.u32 %v1732, %v1733
        %v1735 = vsel %vm928, %v1730, %v1734
        %v1736 = vrot.slane %v1189, 3
        %v1737 = vrot.slane %v1185, 4
        %v1738 = vor.u32 %v1736, %v1737
        %v1739 = vsel %vm928, %v1734, %v1738
        %v1740 = vrot.slane %v1197, 3
        %v1741 = vrot.slane %v1193, 4
        %v1742 = vor.u32 %v1740, %v1741
        %v1743 = vsel %vm928, %v1738, %v1742
        %v1744 = vrot.slane %v1205, 3
        %v1745 = vrot.slane %v1201, 4
        %v1746 = vor.u32 %v1744, %v1745
        %v1747 = vsel %vm928, %v1742, %v1746
        %v1748 = vrot.slane %v1213, 3
        %v1749 = vrot.slane %v1209, 4
        %v1750 = vor.u32 %v1748, %v1749
        %v1751 = vsel %vm928, %v1746, %v1750
        %v1753 = vshrl.u32 %v1683, 16
        %v1755 = vrot.slane %v1753, 3
        %v1756 = vshll.u32 %v1683, 16
        %v1758 = vrot.slane %v1756, 4
        %v1759 = vor.u32 %v1755, %v1758
        %v1760 = vsel %vm928, %v1750, %v1759
        %1761 = vrot.lane.b32.xlu0 %v1695, 60
        %v1762 = vpop.permute.xlu0 %1761
        %1763 = vrot.lane.b32.xlu0 %v1699, 60
        %v1764 = vpop.permute.xlu0 %1763
        %1765 = vrot.lane.b32.xlu0 %v1703, 60
        %v1766 = vpop.permute.xlu0 %1765
        %1767 = vrot.lane.b32.xlu0 %v1707, 60
        %v1768 = vpop.permute.xlu0 %1767
        %1769 = vrot.lane.b32.xlu0 %v1711, 60
        %v1770 = vpop.permute.xlu0 %1769
        %1771 = vrot.lane.b32.xlu0 %v1715, 60
        %v1772 = vpop.permute.xlu0 %1771
        %1773 = vrot.lane.b32.xlu0 %v1719, 60
        %v1774 = vpop.permute.xlu0 %1773
        %1775 = vrot.lane.b32.xlu0 %v1723, 60
        %v1776 = vpop.permute.xlu0 %1775
        %1777 = vrot.lane.b32.xlu0 %v1727, 60
        %v1778 = vpop.permute.xlu0 %1777
        %1779 = vrot.lane.b32.xlu0 %v1731, 60
        %v1780 = vpop.permute.xlu0 %1779
        %1781 = vrot.lane.b32.xlu0 %v1735, 60
        %v1782 = vpop.permute.xlu0 %1781
        %1783 = vrot.lane.b32.xlu0 %v1739, 60
        %v1784 = vpop.permute.xlu0 %1783
        %1785 = vrot.lane.b32.xlu0 %v1743, 60
        %v1786 = vpop.permute.xlu0 %1785
        %1787 = vrot.lane.b32.xlu0 %v1747, 60
        %v1788 = vpop.permute.xlu0 %1787
        %1789 = vrot.lane.b32.xlu0 %v1751, 60
        %v1790 = vpop.permute.xlu0 %1789
        %1791 = vrot.lane.b32.xlu0 %v1760, 60
        %v1792 = vpop.permute.xlu0 %1791
        %vm1793 = vcmask 31744
        %v1795 = vsel %vm1793, %v308, %v461
        %v1797 = vsel %vm1793, %v309, %v463
        %v1799 = vsel %vm1793, %v310, %v465
        %v1801 = vsel %vm1793, %v311, %v467
        %v1803 = vsel %vm1793, %v312, %v469
        %v1805 = vsel %vm1793, %v313, %v471
        %v1807 = vsel %vm1793, %v314, %v473
        %v1809 = vsel %vm1793, %v315, %v475
        %v1811 = vsel %vm1793, %v316, %v477
        %v1813 = vsel %vm1793, %v317, %v479
        %v1815 = vsel %vm1793, %v318, %v481
        %v1817 = vsel %vm1793, %v319, %v483
        %v1819 = vsel %vm1793, %v320, %v485
        %v1821 = vsel %vm1793, %v321, %v487
        %v1823 = vsel %vm1793, %v322, %v489
        %v1825 = vsel %vm1793, %v323, %v491
        %vm1826 = vcmask 64512
        %v1828 = vsel %vm1826, %v1795, %v530
        %v1830 = vsel %vm1826, %v1797, %v532
        %v1832 = vsel %vm1826, %v1799, %v534
        %v1834 = vsel %vm1826, %v1801, %v536
        %v1836 = vsel %vm1826, %v1803, %v538
        %v1838 = vsel %vm1826, %v1805, %v540
        %v1840 = vsel %vm1826, %v1807, %v542
        %v1842 = vsel %vm1826, %v1809, %v544
        %v1844 = vsel %vm1826, %v1811, %v546
        %v1846 = vsel %vm1826, %v1813, %v548
        %v1848 = vsel %vm1826, %v1815, %v550
        %v1850 = vsel %vm1826, %v1817, %v552
        %v1852 = vsel %vm1826, %v1819, %v554
        %v1854 = vsel %vm1826, %v1821, %v556
        %v1856 = vsel %vm1826, %v1823, %v558
        %v1858 = vsel %vm1826, %v1825, %v560
        %vm1859 = vcmask 97280
        %v1861 = vsel %vm1859, %v1828, %v643
        %v1863 = vsel %vm1859, %v1830, %v645
        %v1865 = vsel %vm1859, %v1832, %v647
        %v1867 = vsel %vm1859, %v1834, %v649
        %v1869 = vsel %vm1859, %v1836, %v651
        %v1871 = vsel %vm1859, %v1838, %v653
        %v1873 = vsel %vm1859, %v1840, %v655
        %v1875 = vsel %vm1859, %v1842, %v657
        %v1877 = vsel %vm1859, %v1844, %v659
        %v1879 = vsel %vm1859, %v1846, %v661
        %v1881 = vsel %vm1859, %v1848, %v663
        %v1883 = vsel %vm1859, %v1850, %v665
        %v1885 = vsel %vm1859, %v1852, %v667
        %v1887 = vsel %vm1859, %v1854, %v669
        %v1889 = vsel %vm1859, %v1856, %v671
        %v1891 = vsel %vm1859, %v1858, %v673
        %vm1892 = vcmask 130048
        %v1894 = vsel %vm1892, %v1861, %v712
        %v1896 = vsel %vm1892, %v1863, %v714
        %v1898 = vsel %vm1892, %v1865, %v716
        %v1900 = vsel %vm1892, %v1867, %v718
        %v1902 = vsel %vm1892, %v1869, %v720
        %v1904 = vsel %vm1892, %v1871, %v722
        %v1906 = vsel %vm1892, %v1873, %v724
        %v1908 = vsel %vm1892, %v1875, %v726
        %v1910 = vsel %vm1892, %v1877, %v728
        %v1912 = vsel %vm1892, %v1879, %v730
        %v1914 = vsel %vm1892, %v1881, %v732
        %v1916 = vsel %vm1892, %v1883, %v734
        %v1918 = vsel %vm1892, %v1885, %v736
        %v1920 = vsel %vm1892, %v1887, %v738
        %v1922 = vsel %vm1892, %v1889, %v740
        %v1924 = vsel %vm1892, %v1891, %v742
        %vm1925 = vcmask 162816
        %v1927 = vsel %vm1925, %v1894, %v825
        %v1929 = vsel %vm1925, %v1896, %v827
        %v1931 = vsel %vm1925, %v1898, %v829
        %v1933 = vsel %vm1925, %v1900, %v831
        %v1935 = vsel %vm1925, %v1902, %v833
        %v1937 = vsel %vm1925, %v1904, %v835
        %v1939 = vsel %vm1925, %v1906, %v837
        %v1941 = vsel %vm1925, %v1908, %v839
        %v1943 = vsel %vm1925, %v1910, %v841
        %v1945 = vsel %vm1925, %v1912, %v843
        %v1947 = vsel %vm1925, %v1914, %v845
        %v1949 = vsel %vm1925, %v1916, %v847
        %v1951 = vsel %vm1925, %v1918, %v849
        %v1953 = vsel %vm1925, %v1920, %v851
        %v1955 = vsel %vm1925, %v1922, %v853
        %v1957 = vsel %vm1925, %v1924, %v855
        %vm1958 = vcmask 195584
        %v1960 = vsel %vm1958, %v1927, %v894
        %v1962 = vsel %vm1958, %v1929, %v896
        %v1964 = vsel %vm1958, %v1931, %v898
        %v1966 = vsel %vm1958, %v1933, %v900
        %v1968 = vsel %vm1958, %v1935, %v902
        %v1970 = vsel %vm1958, %v1937, %v904
        %v1972 = vsel %vm1958, %v1939, %v906
        %v1974 = vsel %vm1958, %v1941, %v908
        %v1976 = vsel %vm1958, %v1943, %v910
        %v1978 = vsel %vm1958, %v1945, %v912
        %v1980 = vsel %vm1958, %v1947, %v914
        %v1982 = vsel %vm1958, %v1949, %v916
        %v1984 = vsel %vm1958, %v1951, %v918
        %v1986 = vsel %vm1958, %v1953, %v920
        %v1988 = vsel %vm1958, %v1955, %v922
        %v1990 = vsel %vm1958, %v1957, %v924
        %vm1991 = vcmask 228352
        %v1993 = vsel %vm1991, %v1960, %v1007
        %v1995 = vsel %vm1991, %v1962, %v1009
        %v1997 = vsel %vm1991, %v1964, %v1011
        %v1999 = vsel %vm1991, %v1966, %v1013
        %v2001 = vsel %vm1991, %v1968, %v1015
        %v2003 = vsel %vm1991, %v1970, %v1017
        %v2005 = vsel %vm1991, %v1972, %v1019
        %v2007 = vsel %vm1991, %v1974, %v1021
        %v2009 = vsel %vm1991, %v1976, %v1023
        %v2011 = vsel %vm1991, %v1978, %v1025
        %v2013 = vsel %vm1991, %v1980, %v1027
        %v2015 = vsel %vm1991, %v1982, %v1029
        %v2017 = vsel %vm1991, %v1984, %v1031
        %v2019 = vsel %vm1991, %v1986, %v1033
        %v2021 = vsel %vm1991, %v1988, %v1035
        %v2023 = vsel %vm1991, %v1990, %v1037
        %vm2024 = vcmask 261120
        %v2026 = vsel %vm2024, %v1993, %v1055
        %v2028 = vsel %vm2024, %v1995, %v1057
        %v2030 = vsel %vm2024, %v1997, %v1059
        %v2032 = vsel %vm2024, %v1999, %v1061
        %v2034 = vsel %vm2024, %v2001, %v1063
        %v2036 = vsel %vm2024, %v2003, %v1065
        %v2038 = vsel %vm2024, %v2005, %v1067
        %v2040 = vsel %vm2024, %v2007, %v1069
        %v2042 = vsel %vm2024, %v2009, %v1071
        %v2044 = vsel %vm2024, %v2011, %v1073
        %v2046 = vsel %vm2024, %v2013, %v1075
        %v2048 = vsel %vm2024, %v2015, %v1077
        %v2050 = vsel %vm2024, %v2017, %v1079
        %v2052 = vsel %vm2024, %v2019, %v1081
        %v2054 = vsel %vm2024, %v2021, %v1083
        %v2056 = vsel %vm2024, %v2023, %v1085
        %vm2057 = vcmask 293888
        %v2059 = vsel %vm2057, %v2026, %v1222
        %v2061 = vsel %vm2057, %v2028, %v1224
        %v2063 = vsel %vm2057, %v2030, %v1226
        %v2065 = vsel %vm2057, %v2032, %v1228
        %v2067 = vsel %vm2057, %v2034, %v1230
        %v2069 = vsel %vm2057, %v2036, %v1232
        %v2071 = vsel %vm2057, %v2038, %v1234
        %v2073 = vsel %vm2057, %v2040, %v1236
        %v2075 = vsel %vm2057, %v2042, %v1238
        %v2077 = vsel %vm2057, %v2044, %v1240
        %v2079 = vsel %vm2057, %v2046, %v1242
        %v2081 = vsel %vm2057, %v2048, %v1244
        %v2083 = vsel %vm2057, %v2050, %v1246
        %v2085 = vsel %vm2057, %v2052, %v1248
        %v2087 = vsel %vm2057, %v2054, %v1250
        %v2089 = vsel %vm2057, %v2056, %v1252
        %vm2090 = vcmask 326656
        %v2092 = vsel %vm2090, %v2059, %v1290
        %v2094 = vsel %vm2090, %v2061, %v1292
        %v2096 = vsel %vm2090, %v2063, %v1294
        %v2098 = vsel %vm2090, %v2065, %v1296
        %v2100 = vsel %vm2090, %v2067, %v1298
        %v2102 = vsel %vm2090, %v2069, %v1300
        %v2104 = vsel %vm2090, %v2071, %v1302
        %v2106 = vsel %vm2090, %v2073, %v1304
        %v2108 = vsel %vm2090, %v2075, %v1306
        %v2110 = vsel %vm2090, %v2077, %v1308
        %v2112 = vsel %vm2090, %v2079, %v1310
        %v2114 = vsel %vm2090, %v2081, %v1312
        %v2116 = vsel %vm2090, %v2083, %v1314
        %v2118 = vsel %vm2090, %v2085, %v1316
        %v2120 = vsel %vm2090, %v2087, %v1318
        %v2122 = vsel %vm2090, %v2089, %v1320
        %vm2123 = vcmask 359424
        %v2125 = vsel %vm2123, %v2092, %v1402
        %v2127 = vsel %vm2123, %v2094, %v1404
        %v2129 = vsel %vm2123, %v2096, %v1406
        %v2131 = vsel %vm2123, %v2098, %v1408
        %v2133 = vsel %vm2123, %v2100, %v1410
        %v2135 = vsel %vm2123, %v2102, %v1412
        %v2137 = vsel %vm2123, %v2104, %v1414
        %v2139 = vsel %vm2123, %v2106, %v1416
        %v2141 = vsel %vm2123, %v2108, %v1418
        %v2143 = vsel %vm2123, %v2110, %v1420
        %v2145 = vsel %vm2123, %v2112, %v1422
        %v2147 = vsel %vm2123, %v2114, %v1424
        %v2149 = vsel %vm2123, %v2116, %v1426
        %v2151 = vsel %vm2123, %v2118, %v1428
        %v2153 = vsel %vm2123, %v2120, %v1430
        %v2155 = vsel %vm2123, %v2122, %v1432
        %vm2156 = vcmask 392192
        %v2158 = vsel %vm2156, %v2125, %v1470
        %v2160 = vsel %vm2156, %v2127, %v1472
        %v2162 = vsel %vm2156, %v2129, %v1474
        %v2164 = vsel %vm2156, %v2131, %v1476
        %v2166 = vsel %vm2156, %v2133, %v1478
        %v2168 = vsel %vm2156, %v2135, %v1480
        %v2170 = vsel %vm2156, %v2137, %v1482
        %v2172 = vsel %vm2156, %v2139, %v1484
        %v2174 = vsel %vm2156, %v2141, %v1486
        %v2176 = vsel %vm2156, %v2143, %v1488
        %v2178 = vsel %vm2156, %v2145, %v1490
        %v2180 = vsel %vm2156, %v2147, %v1492
        %v2182 = vsel %vm2156, %v2149, %v1494
        %v2184 = vsel %vm2156, %v2151, %v1496
        %v2186 = vsel %vm2156, %v2153, %v1498
        %v2188 = vsel %vm2156, %v2155, %v1500
        %vm2189 = vcmask 424960
        %v2191 = vsel %vm2189, %v2158, %v1582
        %v2193 = vsel %vm2189, %v2160, %v1584
        %v2195 = vsel %vm2189, %v2162, %v1586
        %v2197 = vsel %vm2189, %v2164, %v1588
        %v2199 = vsel %vm2189, %v2166, %v1590
        %v2201 = vsel %vm2189, %v2168, %v1592
        %v2203 = vsel %vm2189, %v2170, %v1594
        %v2205 = vsel %vm2189, %v2172, %v1596
        %v2207 = vsel %vm2189, %v2174, %v1598
        %v2209 = vsel %vm2189, %v2176, %v1600
        %v2211 = vsel %vm2189, %v2178, %v1602
        %v2213 = vsel %vm2189, %v2180, %v1604
        %v2215 = vsel %vm2189, %v2182, %v1606
        %v2217 = vsel %vm2189, %v2184, %v1608
        %v2219 = vsel %vm2189, %v2186, %v1610
        %v2221 = vsel %vm2189, %v2188, %v1612
        %vm2222 = vcmask 457728
        %v2224 = vsel %vm2222, %v2191, %v1650
        %v2226 = vsel %vm2222, %v2193, %v1652
        %v2228 = vsel %vm2222, %v2195, %v1654
        %v2230 = vsel %vm2222, %v2197, %v1656
        %v2232 = vsel %vm2222, %v2199, %v1658
        %v2234 = vsel %vm2222, %v2201, %v1660
        %v2236 = vsel %vm2222, %v2203, %v1662
        %v2238 = vsel %vm2222, %v2205, %v1664
        %v2240 = vsel %vm2222, %v2207, %v1666
        %v2242 = vsel %vm2222, %v2209, %v1668
        %v2244 = vsel %vm2222, %v2211, %v1670
        %v2246 = vsel %vm2222, %v2213, %v1672
        %v2248 = vsel %vm2222, %v2215, %v1674
        %v2250 = vsel %vm2222, %v2217, %v1676
        %v2252 = vsel %vm2222, %v2219, %v1678
        %v2254 = vsel %vm2222, %v2221, %v1680
        %vm2255 = vcmask 490496
        %v2257 = vsel %vm2255, %v2224, %v1762
        %v2259 = vsel %vm2255, %v2226, %v1764
        %v2261 = vsel %vm2255, %v2228, %v1766
        %v2263 = vsel %vm2255, %v2230, %v1768
        %v2265 = vsel %vm2255, %v2232, %v1770
        %v2267 = vsel %vm2255, %v2234, %v1772
        %v2269 = vsel %vm2255, %v2236, %v1774
        %v2271 = vsel %vm2255, %v2238, %v1776
        %v2273 = vsel %vm2255, %v2240, %v1778
        %v2275 = vsel %vm2255, %v2242, %v1780
        %v2277 = vsel %vm2255, %v2244, %v1782
        %v2279 = vsel %vm2255, %v2246, %v1784
        %v2281 = vsel %vm2255, %v2248, %v1786
        %v2283 = vsel %vm2255, %v2250, %v1788
        %v2285 = vsel %vm2255, %v2252, %v1790
        %v2287 = vsel %vm2255, %v2254, %v1792
        %v2288 = vpack.c.b16 %v1682, %v926
        %v2290 = vunpack.c.l.b16 %v233
        %v2291 = vpack.c.b16 %v2290, %v2290
        %v2293 = vshll.u32 %v2288, 16
        %v2295 = vrot.slane %v2293, 1
        %v2296 = vsel %vm327, %v454, %v2295
        %v2297 = vshrl.u32 %v2288, 16
        %v2299 = vor.u32 %v2297, %v2295
        %v2301 = vshll.u32 %v2291, 16
        %v2303 = vrot.slane %v2301, 1
        %v2304 = vsel %vm327, %v2299, %v2303
        %2305 = vrot.lane.b32.xlu0 %v2296, 4
        %v2306 = vpop.permute.xlu0 %2305
        %2307 = vrot.lane.b32.xlu0 %v2304, 4
        %v2308 = vpop.permute.xlu0 %2307
        %v2310 = vunpack.c.l.b16 %v234
        %v2311 = vpack.c.b16 %v279, %v2310
        %v2312 = vrot.slane %v2311, 1
        %v2313 = vsel %vm495, %v2312, %v499
        %v2314 = vrot.slane %v2288, 1
        %v2315 = vsel %vm495, %v525, %v2314
        %v2316 = vrot.slane %v2291, 1
        %v2317 = vsel %vm495, %v2314, %v2316
        %2318 = vrot.lane.b32.xlu0 %v2313, 8
        %v2319 = vpop.permute.xlu0 %2318
        %2320 = vrot.lane.b32.xlu0 %v2315, 8
        %v2321 = vpop.permute.xlu0 %2320
        %2322 = vrot.lane.b32.xlu0 %v2317, 8
        %v2323 = vpop.permute.xlu0 %2322
        %v2325 = vunpack.c.l.b16 %v235
        %v2326 = vpack.c.b16 %v2325, %v2325
        %v2328 = vshrl.u32 %v2311, 16
        %v2330 = vrot.slane %v2328, 1
        %v2331 = vshll.u32 %v2311, 16
        %v2333 = vrot.slane %v2331, 2
        %v2334 = vor.u32 %v2330, %v2333
        %v2335 = vsel %vm564, %v2334, %v579
        %v2336 = vrot.slane %v2297, 1
        %v2337 = vrot.slane %v2293, 2
        %v2338 = vor.u32 %v2336, %v2337
        %v2339 = vsel %vm564, %v631, %v2338
        %v2341 = vshrl.u32 %v2326, 16
        %v2343 = vrot.slane %v2341, 1
        %v2344 = vshll.u32 %v2326, 16
        %v2346 = vrot.slane %v2344, 2
        %v2347 = vor.u32 %v2343, %v2346
        %v2348 = vsel %vm564, %v2338, %v2347
        %2349 = vrot.lane.b32.xlu0 %v2335, 12
        %v2350 = vpop.permute.xlu0 %2349
        %2351 = vrot.lane.b32.xlu0 %v2339, 12
        %v2352 = vpop.permute.xlu0 %2351
        %2353 = vrot.lane.b32.xlu0 %v2348, 12
        %v2354 = vpop.permute.xlu0 %2353
        %v2356 = vunpack.c.l.b16 %v236
        %v2357 = vpack.c.b16 %v279, %v2356
        %v2358 = vrot.slane %v2357, 2
        %v2359 = vsel %vm677, %v2358, %v681
        %v2360 = vrot.slane %v2288, 2
        %v2361 = vsel %vm677, %v707, %v2360
        %v2362 = vrot.slane %v2326, 2
        %v2363 = vsel %vm677, %v2360, %v2362
        %2364 = vrot.lane.b32.xlu0 %v2359, 16
        %v2365 = vpop.permute.xlu0 %2364
        %2366 = vrot.lane.b32.xlu0 %v2361, 16
        %v2367 = vpop.permute.xlu0 %2366
        %2368 = vrot.lane.b32.xlu0 %v2363, 16
        %v2369 = vpop.permute.xlu0 %2368
        %v2371 = vunpack.c.l.b16 %v237
        %v2372 = vpack.c.b16 %v2371, %v2371
        %v2374 = vshrl.u32 %v2357, 16
        %v2376 = vrot.slane %v2374, 2
        %v2377 = vshll.u32 %v2357, 16
        %v2379 = vrot.slane %v2377, 3
        %v2380 = vor.u32 %v2376, %v2379
        %v2381 = vsel %vm746, %v2380, %v761
        %v2382 = vrot.slane %v2297, 2
        %v2383 = vrot.slane %v2293, 3
        %v2384 = vor.u32 %v2382, %v2383
        %v2385 = vsel %vm746, %v813, %v2384
        %v2387 = vshrl.u32 %v2372, 16
        %v2389 = vrot.slane %v2387, 2
        %v2390 = vshll.u32 %v2372, 16
        %v2392 = vrot.slane %v2390, 3
        %v2393 = vor.u32 %v2389, %v2392
        %v2394 = vsel %vm746, %v2384, %v2393
        %2395 = vrot.lane.b32.xlu0 %v2381, 20
        %v2396 = vpop.permute.xlu0 %2395
        %2397 = vrot.lane.b32.xlu0 %v2385, 20
        %v2398 = vpop.permute.xlu0 %2397
        %2399 = vrot.lane.b32.xlu0 %v2394, 20
        %v2400 = vpop.permute.xlu0 %2399
        %v2402 = vunpack.c.l.b16 %v238
        %v2403 = vpack.c.b16 %v279, %v2402
        %v2404 = vrot.slane %v2403, 3
        %v2405 = vsel %vm859, %v2404, %v863
        %v2406 = vrot.slane %v2288, 3
        %v2407 = vsel %vm859, %v889, %v2406
        %v2408 = vrot.slane %v2372, 3
        %v2409 = vsel %vm859, %v2406, %v2408
        %2410 = vrot.lane.b32.xlu0 %v2405, 24
        %v2411 = vpop.permute.xlu0 %2410
        %2412 = vrot.lane.b32.xlu0 %v2407, 24
        %v2413 = vpop.permute.xlu0 %2412
        %2414 = vrot.lane.b32.xlu0 %v2409, 24
        %v2415 = vpop.permute.xlu0 %2414
        %v2417 = vunpack.c.l.b16 %v239
        %v2418 = vpack.c.b16 %v2417, %v2417
        %v2420 = vshrl.u32 %v2403, 16
        %v2422 = vrot.slane %v2420, 3
        %v2423 = vshll.u32 %v2403, 16
        %v2425 = vrot.slane %v2423, 4
        %v2426 = vor.u32 %v2422, %v2425
        %v2427 = vsel %vm928, %v2426, %v943
        %v2428 = vrot.slane %v2297, 3
        %v2429 = vrot.slane %v2293, 4
        %v2430 = vor.u32 %v2428, %v2429
        %v2431 = vsel %vm928, %v995, %v2430
        %v2433 = vshrl.u32 %v2418, 16
        %v2435 = vrot.slane %v2433, 3
        %v2436 = vshll.u32 %v2418, 16
        %v2438 = vrot.slane %v2436, 4
        %v2439 = vor.u32 %v2435, %v2438
        %v2440 = vsel %vm928, %v2430, %v2439
        %2441 = vrot.lane.b32.xlu0 %v2427, 28
        %v2442 = vpop.permute.xlu0 %2441
        %2443 = vrot.lane.b32.xlu0 %v2431, 28
        %v2444 = vpop.permute.xlu0 %2443
        %2445 = vrot.lane.b32.xlu0 %v2440, 28
        %v2446 = vpop.permute.xlu0 %2445
        %v2447 = vpack.c.b16 %v2417, %v1682
        %2448 = vrot.lane.b32.xlu0 %v2447, 32
        %v2449 = vpop.permute.xlu0 %2448
        %v2451 = vunpack.c.l.b16 %v240
        %v2452 = vpack.c.b16 %v2451, %v2451
        %v2454 = vshll.u32 %v2447, 16
        %v2456 = vrot.slane %v2454, 1
        %v2457 = vsel %vm327, %v1215, %v2456
        %v2458 = vshrl.u32 %v2447, 16
        %v2460 = vor.u32 %v2458, %v2456
        %v2462 = vshll.u32 %v2452, 16
        %v2464 = vrot.slane %v2462, 1
        %v2465 = vsel %vm327, %v2460, %v2464
        %2466 = vrot.lane.b32.xlu0 %v2457, 36
        %v2467 = vpop.permute.xlu0 %2466
        %2468 = vrot.lane.b32.xlu0 %v2465, 36
        %v2469 = vpop.permute.xlu0 %2468
        %v2471 = vunpack.c.l.b16 %v241
        %v2472 = vpack.c.b16 %v280, %v2471
        %v2473 = vrot.slane %v2472, 1
        %v2474 = vsel %vm495, %v2473, %v1259
        %v2475 = vrot.slane %v2447, 1
        %v2476 = vsel %vm495, %v1285, %v2475
        %v2477 = vrot.slane %v2452, 1
        %v2478 = vsel %vm495, %v2475, %v2477
        %2479 = vrot.lane.b32.xlu0 %v2474, 40
        %v2480 = vpop.permute.xlu0 %2479
        %2481 = vrot.lane.b32.xlu0 %v2476, 40
        %v2482 = vpop.permute.xlu0 %2481
        %2483 = vrot.lane.b32.xlu0 %v2478, 40
        %v2484 = vpop.permute.xlu0 %2483
        %v2486 = vunpack.c.l.b16 %v242
        %v2487 = vpack.c.b16 %v2486, %v2486
        %v2489 = vshrl.u32 %v2472, 16
        %v2491 = vrot.slane %v2489, 1
        %v2492 = vshll.u32 %v2472, 16
        %v2494 = vrot.slane %v2492, 2
        %v2495 = vor.u32 %v2491, %v2494
        %v2496 = vsel %vm564, %v2495, %v1338
        %v2497 = vrot.slane %v2458, 1
        %v2498 = vrot.slane %v2454, 2
        %v2499 = vor.u32 %v2497, %v2498
        %v2500 = vsel %vm564, %v1390, %v2499
        %v2502 = vshrl.u32 %v2487, 16
        %v2504 = vrot.slane %v2502, 1
        %v2505 = vshll.u32 %v2487, 16
        %v2507 = vrot.slane %v2505, 2
        %v2508 = vor.u32 %v2504, %v2507
        %v2509 = vsel %vm564, %v2499, %v2508
        %2510 = vrot.lane.b32.xlu0 %v2496, 44
        %v2511 = vpop.permute.xlu0 %2510
        %2512 = vrot.lane.b32.xlu0 %v2500, 44
        %v2513 = vpop.permute.xlu0 %2512
        %2514 = vrot.lane.b32.xlu0 %v2509, 44
        %v2515 = vpop.permute.xlu0 %2514
        %v2517 = vunpack.c.l.b16 %v243
        %v2518 = vpack.c.b16 %v280, %v2517
        %v2519 = vrot.slane %v2518, 2
        %v2520 = vsel %vm677, %v2519, %v1439
        %v2521 = vrot.slane %v2447, 2
        %v2522 = vsel %vm677, %v1465, %v2521
        %v2523 = vrot.slane %v2487, 2
        %v2524 = vsel %vm677, %v2521, %v2523
        %2525 = vrot.lane.b32.xlu0 %v2520, 48
        %v2526 = vpop.permute.xlu0 %2525
        %2527 = vrot.lane.b32.xlu0 %v2522, 48
        %v2528 = vpop.permute.xlu0 %2527
        %2529 = vrot.lane.b32.xlu0 %v2524, 48
        %v2530 = vpop.permute.xlu0 %2529
        %v2532 = vsel %vm1793, %v323, %v2306
        %v2534 = vsel %vm1793, %v2288, %v2308
        %v2536 = vsel %vm1826, %v1797, %v2319
        %v2538 = vsel %vm1826, %v2532, %v2321
        %v2540 = vsel %vm1826, %v2534, %v2323
        %v2542 = vsel %vm1859, %v2536, %v2350
        %v2544 = vsel %vm1859, %v2538, %v2352
        %v2546 = vsel %vm1859, %v2540, %v2354
        %v2548 = vsel %vm1892, %v2542, %v2365
        %v2550 = vsel %vm1892, %v2544, %v2367
        %v2552 = vsel %vm1892, %v2546, %v2369
        %v2554 = vsel %vm1925, %v2548, %v2396
        %v2556 = vsel %vm1925, %v2550, %v2398
        %v2558 = vsel %vm1925, %v2552, %v2400
        %v2560 = vsel %vm1958, %v2554, %v2411
        %v2562 = vsel %vm1958, %v2556, %v2413
        %v2564 = vsel %vm1958, %v2558, %v2415
        %v2566 = vsel %vm1991, %v2560, %v2442
        %v2568 = vsel %vm1991, %v2562, %v2444
        %v2570 = vsel %vm1991, %v2564, %v2446
        %v2571 = vsel %vm2024, %v2566, %v1057
        %v2572 = vsel %vm2024, %v2568, %v1085
        %v2574 = vsel %vm2024, %v2570, %v2449
        %v2575 = vsel %vm2057, %v2571, %v1224
        %v2577 = vsel %vm2057, %v2572, %v2467
        %v2579 = vsel %vm2057, %v2574, %v2469
        %v2581 = vsel %vm2090, %v2575, %v2480
        %v2583 = vsel %vm2090, %v2577, %v2482
        %v2585 = vsel %vm2090, %v2579, %v2484
        %v2587 = vsel %vm2123, %v2581, %v2511
        %v2589 = vsel %vm2123, %v2583, %v2513
        %v2591 = vsel %vm2123, %v2585, %v2515
        %v2593 = vsel %vm2156, %v2587, %v2526
        %v2595 = vsel %vm2156, %v2589, %v2528
        %v2597 = vsel %vm2156, %v2591, %v2530
        %2614 = vrot.lane.b32.xlu0 %v2593, 64
        %v2615 = vpop.permute.xlu0 %2614
        %2616 = vrot.lane.b32.xlu0 %v2162, 64
        %v2617 = vpop.permute.xlu0 %2616
        %2618 = vrot.lane.b32.xlu0 %v2164, 64
        %v2619 = vpop.permute.xlu0 %2618
        %2620 = vrot.lane.b32.xlu0 %v2166, 64
        %v2621 = vpop.permute.xlu0 %2620
        %2622 = vrot.lane.b32.xlu0 %v2168, 64
        %v2623 = vpop.permute.xlu0 %2622
        %2624 = vrot.lane.b32.xlu0 %v2170, 64
        %v2625 = vpop.permute.xlu0 %2624
        %2626 = vrot.lane.b32.xlu0 %v2172, 64
        %v2627 = vpop.permute.xlu0 %2626
        %2628 = vrot.lane.b32.xlu0 %v2174, 64
        %v2629 = vpop.permute.xlu0 %2628
        %2630 = vrot.lane.b32.xlu0 %v2176, 64
        %v2631 = vpop.permute.xlu0 %2630
        %2632 = vrot.lane.b32.xlu0 %v2178, 64
        %v2633 = vpop.permute.xlu0 %2632
        %2634 = vrot.lane.b32.xlu0 %v2180, 64
        %v2635 = vpop.permute.xlu0 %2634
        %2636 = vrot.lane.b32.xlu0 %v2182, 64
        %v2637 = vpop.permute.xlu0 %2636
        %2638 = vrot.lane.b32.xlu0 %v2184, 64
        %v2639 = vpop.permute.xlu0 %2638
        %2640 = vrot.lane.b32.xlu0 %v2186, 64
        %v2641 = vpop.permute.xlu0 %2640
        %2642 = vrot.lane.b32.xlu0 %v2595, 64
        %v2643 = vpop.permute.xlu0 %2642
        %2644 = vrot.lane.b32.xlu0 %v2597, 64
        %v2645 = vpop.permute.xlu0 %2644
        %vm2646 = vcmask 523264
        %v2648 = vsel %vm2646, %v2257, %v2615
        %v2650 = vsel %vm2646, %v2259, %v2617
        %v2652 = vsel %vm2646, %v2261, %v2619
        %v2654 = vsel %vm2646, %v2263, %v2621
        %v2656 = vsel %vm2646, %v2265, %v2623
        %v2658 = vsel %vm2646, %v2267, %v2625
        %v2660 = vsel %vm2646, %v2269, %v2627
        %v2662 = vsel %vm2646, %v2271, %v2629
        %v2664 = vsel %vm2646, %v2273, %v2631
        %v2666 = vsel %vm2646, %v2275, %v2633
        %v2668 = vsel %vm2646, %v2277, %v2635
        %v2670 = vsel %vm2646, %v2279, %v2637
        %v2672 = vsel %vm2646, %v2281, %v2639
        %v2674 = vsel %vm2646, %v2283, %v2641
        %v2676 = vsel %vm2646, %v2285, %v2643
        %v2678 = vsel %vm2646, %v2287, %v2645
        %v2679 = vld [vmem:[%s1] sm:$0xf]
        %v2680 = vld [vmem:[%s1 + $0x4] sm:$0xf]
        %v2681 = vld [vmem:[%s1 + $0x8] sm:$0xf]
        %v2682 = vld [vmem:[%s1 + $0xc] sm:$0xf]
        %v2683 = vld [vmem:[%s1 + $0x10] sm:$0xf]
        %v2684 = vld [vmem:[%s1 + $0x14] sm:$0xf]
        %v2685 = vld [vmem:[%s1 + $0x18] sm:$0xf]
        %v2686 = vld [vmem:[%s1 + $0x1c] sm:$0xf]
        %v2687 = vld [vmem:[%s1 + $0x20] sm:$0xf]
        %v2688 = vld [vmem:[%s1 + $0x24] sm:$0xf]
        %v2689 = vld [vmem:[%s1 + $0x28] sm:$0xf]
        %v2690 = vld [vmem:[%s1 + $0x2c] sm:$0xf]
        %v2691 = vld [vmem:[%s1 + $0x30] sm:$0xf]
        %v2692 = vld [vmem:[%s1 + $0x34] sm:$0xf]
        %v2693 = vld [vmem:[%s1 + $0x38] sm:$0x3]
        %v2709 = vunpack.c.l.b16 %v2679
        %v2710 = vunpack.c.l.b16 %v2680
        %v2711 = vunpack.c.l.b16 %v2681
        %v2712 = vunpack.c.l.b16 %v2682
        %v2713 = vunpack.c.l.b16 %v2683
        %v2714 = vunpack.c.l.b16 %v2684
        %v2715 = vunpack.c.l.b16 %v2685
        %v2716 = vunpack.c.l.b16 %v2686
        %v2717 = vunpack.c.l.b16 %v2687
        %v2718 = vunpack.c.l.b16 %v2688
        %v2719 = vunpack.c.l.b16 %v2689
        %v2720 = vunpack.c.l.b16 %v2690
        %v2721 = vunpack.c.l.b16 %v2691
        %v2722 = vunpack.c.l.b16 %v2692
        %v2723 = vunpack.c.l.b16 %v2693
        %v2724 = vpack.c.b16 %v2710, %v2709
        %v2725 = vpack.c.b16 %v2712, %v2711
        %v2726 = vpack.c.b16 %v2714, %v2713
        %v2727 = vpack.c.b16 %v2716, %v2715
        %v2728 = vpack.c.b16 %v2718, %v2717
        %v2729 = vpack.c.b16 %v2720, %v2719
        %v2730 = vpack.c.b16 %v2722, %v2721
        %v2731 = vpack.c.b16 %v2723, %v2723
        %vm2739 = vcmask 949248
        %v2740 = vsel %vm2739, %v2648, 0
        %v2742 = vsel %vm2739, %v2650, 0
        %v2744 = vsel %vm2739, %v2652, 0
        %v2746 = vsel %vm2739, %v2654, 0
        %v2748 = vsel %vm2739, %v2656, 0
        %v2750 = vsel %vm2739, %v2658, 0
        %v2752 = vsel %vm2739, %v2660, 0
        %v2754 = vsel %vm2739, %v2662, 0
        %v2756 = vsel %vm2739, %v2664, 0
        %v2758 = vsel %vm2739, %v2666, 0
        %v2760 = vsel %vm2739, %v2668, 0
        %v2762 = vsel %vm2739, %v2670, 0
        %v2764 = vsel %vm2739, %v2672, 0
        %v2766 = vsel %vm2739, %v2674, 0
        %v2768 = vsel %vm2739, %v2676, 0
        %v2770 = vsel %vm2739, %v2678, 0
        %vm2772 = vcmask 1041408
        %v2774 = vsel %vm2772, %v2731, 0
        %2776 = vmatprep.subr.bf16.mxu0 0
        %2777 = vmatpush1.bf16.msra.mxu0 %v2774
        %2778 = vmatprep.subr.bf16.mxu0 0
        %2779 = vmatpush1.bf16.msra.mxu0 %v2730
        %2780 = vmatprep.subr.bf16.mxu0 0
        %2781 = vmatpush1.bf16.msra.mxu0 %v2729
        %2782 = vmatprep.subr.bf16.mxu0 0
        %2783 = vmatpush1.bf16.msra.mxu0 %v2728
        %2784 = vmatprep.subr.bf16.mxu0 0
        %2785 = vmatpush1.bf16.msra.mxu0 %v2727
        %2786 = vmatprep.subr.bf16.mxu0 0
        %2787 = vmatpush1.bf16.msra.mxu0 %v2726
        %2788 = vmatprep.subr.bf16.mxu0 0
        %2789 = vmatpush1.bf16.msra.mxu0 %v2725
        %2790 = vmatprep.subr.bf16.mxu0 0
        %2791 = vmatpush1.bf16.msra.mxu0 %v2724
        %2792 = vmatprep.subr.bf16.mxu0 0
        %2793 = vmatpush2.bf16.msra.mxu0 0
        %2794 = vmatprep.subr.bf16.mxu0 0
        %2795 = vmatpush2.bf16.msra.mxu0 0
        %2796 = vmatprep.subr.bf16.mxu0 0
        %2797 = vmatpush2.bf16.msra.mxu0 0
        %2798 = vmatprep.subr.bf16.mxu0 0
        %2799 = vmatpush2.bf16.msra.mxu0 0
        %2800 = vmatprep.subr.bf16.mxu0 0
        %2801 = vmatpush2.bf16.msra.mxu0 0
        %2802 = vmatprep.subr.bf16.mxu0 0
        %2803 = vmatpush2.bf16.msra.mxu0 0
        %2804 = vmatprep.subr.bf16.mxu0 0
        %2805 = vmatpush2.bf16.msra.mxu0 0
        %2806 = vmatprep.subr.bf16.mxu0 0
        %2807 = vmatpush2.bf16.msra.mxu0 0
        %2808 = vmatprep.mubr.bf16.mxu0 0
        %2809 = vmatmul.mubr.bf16.gmra.mxu0 %v2740
        %v2810 = vpop.f32.mrf.mxu0
        %v2811 = vadd.f32 0.0, %v2810
        %v2812 = vpop.f32.mrf.mxu0
        %v2813 = vpop.f32.mrf.mxu0
        %v2814 = vadd.f32 0.0, %v2813
        %v2815 = vpop.f32.mrf.mxu0
        %2816 = vmatprep.mubr.bf16.mxu0 0
        %2817 = vmatmul.mubr.bf16.gmra.mxu0 %v2742
        %v2818 = vpop.f32.mrf.mxu0
        %v2819 = vadd.f32 0.0, %v2818
        %v2820 = vpop.f32.mrf.mxu0
        %v2821 = vpop.f32.mrf.mxu0
        %v2822 = vadd.f32 0.0, %v2821
        %v2823 = vpop.f32.mrf.mxu0
        %2824 = vmatprep.mubr.bf16.mxu0 0
        %2825 = vmatmul.mubr.bf16.gmra.mxu0 %v2744
        %v2826 = vpop.f32.mrf.mxu0
        %v2827 = vadd.f32 0.0, %v2826
        %v2828 = vpop.f32.mrf.mxu0
        %v2829 = vpop.f32.mrf.mxu0
        %v2830 = vadd.f32 0.0, %v2829
        %v2831 = vpop.f32.mrf.mxu0
        %2832 = vmatprep.mubr.bf16.mxu0 0
        %2833 = vmatmul.mubr.bf16.gmra.mxu0 %v2746
        %v2834 = vpop.f32.mrf.mxu0
        %v2835 = vadd.f32 0.0, %v2834
        %v2836 = vpop.f32.mrf.mxu0
        %v2837 = vpop.f32.mrf.mxu0
        %v2838 = vadd.f32 0.0, %v2837
        %v2839 = vpop.f32.mrf.mxu0
        %2840 = vmatprep.mubr.bf16.mxu0 0
        %2841 = vmatmul.mubr.bf16.gmra.mxu0 %v2748
        %v2842 = vpop.f32.mrf.mxu0
        %v2843 = vadd.f32 0.0, %v2842
        %v2844 = vpop.f32.mrf.mxu0
        %v2845 = vpop.f32.mrf.mxu0
        %v2846 = vadd.f32 0.0, %v2845
        %v2847 = vpop.f32.mrf.mxu0
        %2848 = vmatprep.mubr.bf16.mxu0 0
        %2849 = vmatmul.mubr.bf16.gmra.mxu0 %v2750
        %v2850 = vpop.f32.mrf.mxu0
        %v2851 = vadd.f32 0.0, %v2850
        %v2852 = vpop.f32.mrf.mxu0
        %v2853 = vpop.f32.mrf.mxu0
        %v2854 = vadd.f32 0.0, %v2853
        %v2855 = vpop.f32.mrf.mxu0
        %2856 = vmatprep.mubr.bf16.mxu0 0
        %2857 = vmatmul.mubr.bf16.gmra.mxu0 %v2752
        %v2858 = vpop.f32.mrf.mxu0
        %v2859 = vadd.f32 0.0, %v2858
        %v2860 = vpop.f32.mrf.mxu0
        %v2861 = vpop.f32.mrf.mxu0
        %v2862 = vadd.f32 0.0, %v2861
        %v2863 = vpop.f32.mrf.mxu0
        %2864 = vmatprep.mubr.bf16.mxu0 0
        %2865 = vmatmul.mubr.bf16.gmra.mxu0 %v2754
        %v2866 = vpop.f32.mrf.mxu0
        %v2867 = vadd.f32 0.0, %v2866
        %v2868 = vpop.f32.mrf.mxu0
        %v2869 = vpop.f32.mrf.mxu0
        %v2870 = vadd.f32 0.0, %v2869
        %v2871 = vpop.f32.mrf.mxu0
        %2872 = vmatprep.mubr.bf16.mxu0 0
        %2873 = vmatmul.mubr.bf16.gmra.mxu0 %v2756
        %v2874 = vpop.f32.mrf.mxu0
        %v2875 = vadd.f32 0.0, %v2874
        %v2876 = vpop.f32.mrf.mxu0
        %v2877 = vpop.f32.mrf.mxu0
        %v2878 = vadd.f32 0.0, %v2877
        %v2879 = vpop.f32.mrf.mxu0
        %2880 = vmatprep.mubr.bf16.mxu0 0
        %2881 = vmatmul.mubr.bf16.gmra.mxu0 %v2758
        %v2882 = vpop.f32.mrf.mxu0
        %v2883 = vadd.f32 0.0, %v2882
        %v2884 = vpop.f32.mrf.mxu0
        %v2885 = vpop.f32.mrf.mxu0
        %v2886 = vadd.f32 0.0, %v2885
        %v2887 = vpop.f32.mrf.mxu0
        %2888 = vmatprep.mubr.bf16.mxu0 0
        %2889 = vmatmul.mubr.bf16.gmra.mxu0 %v2760
        %v2890 = vpop.f32.mrf.mxu0
        %v2891 = vadd.f32 0.0, %v2890
        %v2892 = vpop.f32.mrf.mxu0
        %v2893 = vpop.f32.mrf.mxu0
        %v2894 = vadd.f32 0.0, %v2893
        %v2895 = vpop.f32.mrf.mxu0
        %2896 = vmatprep.mubr.bf16.mxu0 0
        %2897 = vmatmul.mubr.bf16.gmra.mxu0 %v2762
        %v2898 = vpop.f32.mrf.mxu0
        %v2899 = vadd.f32 0.0, %v2898
        %v2900 = vpop.f32.mrf.mxu0
        %v2901 = vpop.f32.mrf.mxu0
        %v2902 = vadd.f32 0.0, %v2901
        %v2903 = vpop.f32.mrf.mxu0
        %2904 = vmatprep.mubr.bf16.mxu0 0
        %2905 = vmatmul.mubr.bf16.gmra.mxu0 %v2764
        %v2906 = vpop.f32.mrf.mxu0
        %v2907 = vadd.f32 0.0, %v2906
        %v2908 = vpop.f32.mrf.mxu0
        %v2909 = vpop.f32.mrf.mxu0
        %v2910 = vadd.f32 0.0, %v2909
        %v2911 = vpop.f32.mrf.mxu0
        %2912 = vmatprep.mubr.bf16.mxu0 0
        %2913 = vmatmul.mubr.bf16.gmra.mxu0 %v2766
        %v2914 = vpop.f32.mrf.mxu0
        %v2915 = vadd.f32 0.0, %v2914
        %v2916 = vpop.f32.mrf.mxu0
        %v2917 = vpop.f32.mrf.mxu0
        %v2918 = vadd.f32 0.0, %v2917
        %v2919 = vpop.f32.mrf.mxu0
        %2920 = vmatprep.mubr.bf16.mxu0 0
        %2921 = vmatmul.mubr.bf16.gmra.mxu0 %v2768
        %v2922 = vpop.f32.mrf.mxu0
        %v2923 = vadd.f32 0.0, %v2922
        %v2924 = vpop.f32.mrf.mxu0
        %v2925 = vpop.f32.mrf.mxu0
        %v2926 = vadd.f32 0.0, %v2925
        %v2927 = vpop.f32.mrf.mxu0
        %2928 = vmatprep.mubr.bf16.mxu0 0
        %2929 = vmatmul.mubr.bf16.gmra.mxu0 %v2770
        %v2930 = vpop.f32.mrf.mxu0
        %v2931 = vadd.f32 0.0, %v2930
        %v2932 = vpop.f32.mrf.mxu0
        %v2933 = vpop.f32.mrf.mxu0
        %v2934 = vadd.f32 0.0, %v2933
        %v2935 = vpop.f32.mrf.mxu0
        %2936 = vdwg.mxu0
        %v2937 = vld [vmem:[%s185] sm:$0x3]
        %v2938 = vlaneseq
        %v2939 = vshrl.u32 %v2938, 7
        %v2940 = vsub.s32 0, %v2939
        %v2941 = vrot.slane %v2937, %v2940
        %v2942 = vsub.f32 %v2811, %v2941
        %v2943 = vsub.f32 %v2814, %v2941
        %v2944 = vsub.f32 %v2819, %v2941
        %v2945 = vsub.f32 %v2822, %v2941
        %v2946 = vsub.f32 %v2827, %v2941
        %v2947 = vsub.f32 %v2830, %v2941
        %v2948 = vsub.f32 %v2835, %v2941
        %v2949 = vsub.f32 %v2838, %v2941
        %v2950 = vsub.f32 %v2843, %v2941
        %v2951 = vsub.f32 %v2846, %v2941
        %v2952 = vsub.f32 %v2851, %v2941
        %v2953 = vsub.f32 %v2854, %v2941
        %v2954 = vsub.f32 %v2859, %v2941
        %v2955 = vsub.f32 %v2862, %v2941
        %v2956 = vsub.f32 %v2867, %v2941
        %v2957 = vsub.f32 %v2870, %v2941
        %v2958 = vsub.f32 %v2875, %v2941
        %v2959 = vsub.f32 %v2878, %v2941
        %v2960 = vsub.f32 %v2883, %v2941
        %v2961 = vsub.f32 %v2886, %v2941
        %v2962 = vsub.f32 %v2891, %v2941
        %v2963 = vsub.f32 %v2894, %v2941
        %v2964 = vsub.f32 %v2899, %v2941
        %v2965 = vsub.f32 %v2902, %v2941
        %v2966 = vsub.f32 %v2907, %v2941
        %v2967 = vsub.f32 %v2910, %v2941
        %v2968 = vsub.f32 %v2915, %v2941
        %v2969 = vsub.f32 %v2918, %v2941
        %v2970 = vsub.f32 %v2923, %v2941
        %v2971 = vsub.f32 %v2926, %v2941
        %v2972 = vsub.f32 %v2931, %v2941
        %v2973 = vsub.f32 %v2934, %v2941
        %v2974 = vlaneseq
        %v2975 = vshrl.u32 %v2974, 7
        %v2976 = vsub.s32 1, %v2975
        %v2977 = vrot.slane %v2937, %v2976
        %v2978 = vrcp.pop %v2977
        %v2979 = vmul.f32 %v2942, %v2978
        %v2980 = vmul.f32 %v2943, %v2978
        %v2981 = vmul.f32 %v2944, %v2978
        %v2982 = vmul.f32 %v2945, %v2978
        %v2983 = vmul.f32 %v2946, %v2978
        %v2984 = vmul.f32 %v2947, %v2978
        %v2985 = vmul.f32 %v2948, %v2978
        %v2986 = vmul.f32 %v2949, %v2978
        %v2987 = vmul.f32 %v2950, %v2978
        %v2988 = vmul.f32 %v2951, %v2978
        %v2989 = vmul.f32 %v2952, %v2978
        %v2990 = vmul.f32 %v2953, %v2978
        %v2991 = vmul.f32 %v2954, %v2978
        %v2992 = vmul.f32 %v2955, %v2978
        %v2993 = vmul.f32 %v2956, %v2978
        %v2994 = vmul.f32 %v2957, %v2978
        %v2995 = vmul.f32 %v2958, %v2978
        %v2996 = vmul.f32 %v2959, %v2978
        %v2997 = vmul.f32 %v2960, %v2978
        %v2998 = vmul.f32 %v2961, %v2978
        %v2999 = vmul.f32 %v2962, %v2978
        %v3000 = vmul.f32 %v2963, %v2978
        %v3001 = vmul.f32 %v2964, %v2978
        %v3002 = vmul.f32 %v2965, %v2978
        %v3003 = vmul.f32 %v2966, %v2978
        %v3004 = vmul.f32 %v2967, %v2978
        %v3005 = vmul.f32 %v2968, %v2978
        %v3006 = vmul.f32 %v2969, %v2978
        %v3007 = vmul.f32 %v2970, %v2978
        %v3008 = vmul.f32 %v2971, %v2978
        %v3009 = vmul.f32 %v2972, %v2978
        %v3010 = vmul.f32 %v2973, %v2978
        %v3011 = vmax.f32 %v2979, 0.0
        %v3012 = vmax.f32 %v2980, 0.0
        %v3013 = vmax.f32 %v2981, 0.0
        %v3014 = vmax.f32 %v2982, 0.0
        %v3015 = vmax.f32 %v2983, 0.0
        %v3016 = vmax.f32 %v2984, 0.0
        %v3017 = vmax.f32 %v2985, 0.0
        %v3018 = vmax.f32 %v2986, 0.0
        %v3019 = vmax.f32 %v2987, 0.0
        %v3020 = vmax.f32 %v2988, 0.0
        %v3021 = vmax.f32 %v2989, 0.0
        %v3022 = vmax.f32 %v2990, 0.0
        %v3023 = vmax.f32 %v2991, 0.0
        %v3024 = vmax.f32 %v2992, 0.0
        %v3025 = vmax.f32 %v2993, 0.0
        %v3026 = vmax.f32 %v2994, 0.0
        %v3027 = vmax.f32 %v2995, 0.0
        %v3028 = vmax.f32 %v2996, 0.0
        %v3029 = vmax.f32 %v2997, 0.0
        %v3030 = vmax.f32 %v2998, 0.0
        %v3031 = vmax.f32 %v2999, 0.0
        %v3032 = vmax.f32 %v3000, 0.0
        %v3033 = vmax.f32 %v3001, 0.0
        %v3034 = vmax.f32 %v3002, 0.0
        %v3035 = vmax.f32 %v3003, 0.0
        %v3036 = vmax.f32 %v3004, 0.0
        %v3037 = vmax.f32 %v3005, 0.0
        %v3038 = vmax.f32 %v3006, 0.0
        %v3039 = vmax.f32 %v3007, 0.0
        %v3040 = vmax.f32 %v3008, 0.0
        %v3041 = vmax.f32 %v3009, 0.0
        %v3042 = vmax.f32 %v3010, 0.0
        %v3043 = vpack.c.bf16 %v3012, %v3011
        %v3044 = vpack.c.bf16 %v3014, %v3013
        %v3045 = vpack.c.bf16 %v3016, %v3015
        %v3046 = vpack.c.bf16 %v3018, %v3017
        %v3047 = vpack.c.bf16 %v3020, %v3019
        %v3048 = vpack.c.bf16 %v3022, %v3021
        %v3049 = vpack.c.bf16 %v3024, %v3023
        %v3050 = vpack.c.bf16 %v3026, %v3025
        %v3051 = vpack.c.bf16 %v3028, %v3027
        %v3052 = vpack.c.bf16 %v3030, %v3029
        %v3053 = vpack.c.bf16 %v3032, %v3031
        %v3054 = vpack.c.bf16 %v3034, %v3033
        %v3055 = vpack.c.bf16 %v3036, %v3035
        %v3056 = vpack.c.bf16 %v3038, %v3037
        %v3057 = vpack.c.bf16 %v3040, %v3039
        %v3058 = vpack.c.bf16 %v3042, %v3041
        %v3075 = vunpack.c.l.b16 %v3043
        %v3076 = vunpack.c.h.b16 %v3043
        %v3077 = vunpack.c.l.b16 %v3044
        %v3078 = vunpack.c.h.b16 %v3044
        %v3079 = vunpack.c.l.b16 %v3045
        %v3080 = vunpack.c.h.b16 %v3045
        %v3081 = vunpack.c.l.b16 %v3046
        %v3082 = vunpack.c.h.b16 %v3046
        %v3083 = vunpack.c.l.b16 %v3047
        %v3084 = vunpack.c.h.b16 %v3047
        %v3085 = vunpack.c.l.b16 %v3048
        %v3086 = vunpack.c.h.b16 %v3048
        %v3087 = vunpack.c.l.b16 %v3049
        %v3088 = vunpack.c.h.b16 %v3049
        %v3089 = vunpack.c.l.b16 %v3050
        %v3090 = vunpack.c.h.b16 %v3050
        %v3091 = vunpack.c.l.b16 %v3051
        %v3092 = vunpack.c.h.b16 %v3051
        %v3093 = vunpack.c.l.b16 %v3052
        %v3094 = vunpack.c.h.b16 %v3052
        %v3095 = vunpack.c.l.b16 %v3053
        %v3096 = vunpack.c.h.b16 %v3053
        %v3097 = vunpack.c.l.b16 %v3054
        %v3098 = vunpack.c.h.b16 %v3054
        %v3099 = vunpack.c.l.b16 %v3055
        %v3100 = vunpack.c.h.b16 %v3055
        %v3101 = vunpack.c.l.b16 %v3056
        %v3102 = vunpack.c.h.b16 %v3056
        %v3103 = vunpack.c.l.b16 %v3057
        %v3104 = vunpack.c.h.b16 %v3057
        %v3105 = vunpack.c.l.b16 %v3058
        %v3106 = vunpack.c.h.b16 %v3058
        %v3107 = vpack.c.b16 %v3075, %v3075
        %v3108 = vpack.c.b16 %v3076, %v3076
        %v3109 = vpack.c.b16 %v3077, %v3077
        %v3110 = vpack.c.b16 %v3078, %v3078
        %v3111 = vpack.c.b16 %v3079, %v3079
        %v3112 = vpack.c.b16 %v3080, %v3080
        %v3113 = vpack.c.b16 %v3081, %v3081
        %v3114 = vpack.c.b16 %v3082, %v3082
        %v3115 = vpack.c.b16 %v3083, %v3083
        %v3116 = vpack.c.b16 %v3084, %v3084
        %v3117 = vpack.c.b16 %v3085, %v3085
        %v3118 = vpack.c.b16 %v3086, %v3086
        %v3119 = vpack.c.b16 %v3087, %v3087
        %v3120 = vpack.c.b16 %v3088, %v3088
        %v3121 = vpack.c.b16 %v3089, %v3089
        %v3122 = vpack.c.b16 %v3090, %v3090
        %v3123 = vpack.c.b16 %v3091, %v3091
        %v3124 = vpack.c.b16 %v3092, %v3092
        %v3125 = vpack.c.b16 %v3093, %v3093
        %v3126 = vpack.c.b16 %v3094, %v3094
        %v3127 = vpack.c.b16 %v3095, %v3095
        %v3128 = vpack.c.b16 %v3096, %v3096
        %v3129 = vpack.c.b16 %v3097, %v3097
        %v3130 = vpack.c.b16 %v3098, %v3098
        %v3131 = vpack.c.b16 %v3099, %v3099
        %v3132 = vpack.c.b16 %v3100, %v3100
        %v3133 = vpack.c.b16 %v3101, %v3101
        %v3134 = vpack.c.b16 %v3102, %v3102
        %v3135 = vpack.c.b16 %v3103, %v3103
        %v3136 = vpack.c.b16 %v3104, %v3104
        %v3137 = vpack.c.b16 %v3105, %v3105
        %v3138 = vpack.c.b16 %v3106, %v3106
        %3171 = vst [vmem:[%s176] sm:$0xf] %v3107
        %3172 = vst [vmem:[%s176 + $0x4] sm:$0xf] %v3108
        %3173 = vst [vmem:[%s176 + $0x8] sm:$0xf] %v3109
        %3174 = vst [vmem:[%s176 + $0xc] sm:$0xf] %v3110
        %3175 = vst [vmem:[%s176 + $0x10] sm:$0xf] %v3111
        %3176 = vst [vmem:[%s176 + $0x14] sm:$0xf] %v3112
        %3177 = vst [vmem:[%s176 + $0x18] sm:$0xf] %v3113
        %3178 = vst [vmem:[%s176 + $0x1c] sm:$0xf] %v3114
        %3179 = vst [vmem:[%s176 + $0x20] sm:$0xf] %v3115
        %3180 = vst [vmem:[%s176 + $0x24] sm:$0xf] %v3116
        %3181 = vst [vmem:[%s176 + $0x28] sm:$0xf] %v3117
        %3182 = vst [vmem:[%s176 + $0x2c] sm:$0xf] %v3118
        %3183 = vst [vmem:[%s176 + $0x30] sm:$0xf] %v3119
        %3184 = vst [vmem:[%s176 + $0x34] sm:$0xf] %v3120
        %3185 = vst [vmem:[%s176 + $0x38] sm:$0xf] %v3121
        %3186 = vst [vmem:[%s176 + $0x3c] sm:$0xf] %v3122
        %3187 = vst [vmem:[%s176 + $0x40] sm:$0xf] %v3123
        %3188 = vst [vmem:[%s176 + $0x44] sm:$0xf] %v3124
        %3189 = vst [vmem:[%s176 + $0x48] sm:$0xf] %v3125
        %3190 = vst [vmem:[%s176 + $0x4c] sm:$0xf] %v3126
        %3191 = vst [vmem:[%s176 + $0x50] sm:$0xf] %v3127
        %3192 = vst [vmem:[%s176 + $0x54] sm:$0xf] %v3128
        %3193 = vst [vmem:[%s176 + $0x58] sm:$0xf] %v3129
        %3194 = vst [vmem:[%s176 + $0x5c] sm:$0xf] %v3130
        %3195 = vst [vmem:[%s176 + $0x60] sm:$0xf] %v3131
        %3196 = vst [vmem:[%s176 + $0x64] sm:$0xf] %v3132
        %3197 = vst [vmem:[%s176 + $0x68] sm:$0xf] %v3133
        %3198 = vst [vmem:[%s176 + $0x6c] sm:$0xf] %v3134
        %3199 = vst [vmem:[%s176 + $0x70] sm:$0xf] %v3135
        %3200 = vst [vmem:[%s176 + $0x74] sm:$0xf] %v3136
        %3201 = vst [vmem:[%s176 + $0x78] sm:$0xf] %v3137
        %3202 = vst [vmem:[%s176 + $0x7c] sm:$0xf] %v3138
        %s3203 = sand.u32 %s98, 1
        %s3204 = scalar_lea.sflag [#allocation3], %s3203
        %s3205 = sand.u32 %s98, 1
        %s3206 = smul.addr %s3205, 128
        %s3207 = scalar_lea.vmem [#allocation2], %s3206
        // Predicated region
        $region33: #{tpu_custom_call.1} parent=31 // pred_check
          %p3208 = pneg %p108
        $region34: #{tpu_custom_call.1} parent=31 // pred_check_branch
          %3210 = sbr.rel (%p3208) target = $region36
        $region35: #{tpu_custom_call.1} parent=31 // pred_region
          %s3212 = ssub.s32 2048, 2048
          %3213 = vsyncadd %s3204, %s3212
          %s3214 = smul.addr %s17, 32
          %s3215 = smul.addr %s3214, 64
          %s3216 = scalar_lea.hbm %s3, %s3215
          %s3217 = sshll.u32 %s3207, 4
          %s3218 = int_to_ptr.vmem [resolvable:$true] %s3217
          %3223 = dma.vmem_to_hbm [thread:$0]  %s3218, 2048, %s3216, %s3204, 64, 64, 4
        $region36: #{tpu_custom_call.1} parent=31 // pred_fallthru
          _
      $region32: #{tpu_custom_call.1} parent=5 // pred_fallthru
        _
      %p3224 = scmp.le.s32.totalorder 2, %s12
      // Predicated region
      $region37: #{tpu_custom_call.1} parent=5 // pred_check
        %p3225 = pneg %p3224
      $region38: #{tpu_custom_call.1} parent=5 // pred_check_branch
        %3227 = sbr.rel (%p3225) target = $region40
      $region39: #{tpu_custom_call.1} parent=5 // pred_region
        %s3228 = ssub.s32 %s12, 2
        // Predicated region
        $region41: #{tpu_custom_call.1} parent=39 // pred_check
          %p3229 = pneg %p114
        $region42: #{tpu_custom_call.1} parent=39 // pred_check_branch
          %3231 = sbr.rel (%p3229) target = $region44
        $region43: #{tpu_custom_call.1} parent=39 // pred_region
          %s3232 = sand.u32 %s99, 1
          %s3233 = scalar_lea.sflag [#allocation3], %s3232
          %s3234 = sand.u32 %s99, 1
          %s3235 = smul.addr %s3234, 128
          %s3236 = scalar_lea.vmem [#allocation2], %s3235
          %3237 = dma.done %s3233, 2048
        $region44: #{tpu_custom_call.1} parent=39 // pred_fallthru
          _
      $region40: #{tpu_custom_call.1} parent=5 // pred_fallthru
        _
    $region6: #{tpu_custom_call.1} parent=1 // loop_footer
      %s16 = sadd.s32 1, %s12
    $region7: #{tpu_custom_call.1} parent=1 // loop_footer_branch
      %11 = sbr.rel target = $region3
    $region8: #{tpu_custom_call.1} parent=1 // loop_exit
      _
    %3238 = vsyncpa [#allocation3], 1
    %s3239 = scalar_lea.sflag [#allocation3], 1
    %3240 = vsyncpa %s3239, 1

</llo_original>
